<compile_context>
chip_gen: v5e
topology: v5e:2x2
jax: 0.10.0
libtpu: 0.0.40
codegen_flags: <defaults>
</compile_context>

<pallas_src>
import jax
import jax.numpy as jnp
from jax.experimental import pallas as pl
from jax.experimental.pallas import tpu as pltpu

_LANES = 128                 # every contraction / channel dim is lane-padded
_MXU_DTYPE = jnp.bfloat16    # MXU operand dtype (accumulation stays f32)


# --------------------------- parameter handling -----------------------------

def conv_weight_to_matmul(w_oihw):
    """PyTorch (OC, IC, KH, KW) -> (KH*KW*IC, OC) row ordering (kh, kw, ic)."""
    oc, ic, kh, kw = w_oihw.shape
    return jnp.transpose(w_oihw, (2, 3, 1, 0)).reshape(kh * kw * ic, oc)


def init_params(key, in_image_dim, characteristic_dim):
    """Deterministic synthetic init mirroring the module's shapes (same RNG as before)."""
    i_t_dim = characteristic_dim - 5
    now_dim = in_image_dim
    now_dim -= 5 - 1   # conv1 k=5
    now_dim //= 2      # pool1
    now_dim -= 3 - 1   # conv2 k=3
    now_dim //= 2      # pool2
    flat_dim = 32 * now_dim ** 2

    ks = jax.random.split(key, 6)

    def uni(k, shape, fan_in):
        bound = 1.0 / jnp.sqrt(float(fan_in))
        return jax.random.uniform(k, shape, jnp.float32, -bound, bound)

    w1_oihw = uni(ks[0], (16, 3, 5, 5), 3 * 5 * 5)
    b1 = uni(ks[1], (16,), 3 * 5 * 5)
    w2_oihw = uni(ks[2], (32, 16, 3, 3), 16 * 3 * 3)
    b2 = uni(ks[3], (32,), 16 * 3 * 3)
    wfc = uni(ks[4], (flat_dim, i_t_dim), flat_dim)
    bfc = uni(ks[5], (i_t_dim,), flat_dim)

    return {
        "w1": conv_weight_to_matmul(w1_oihw), "b1": b1,
        "w2": conv_weight_to_matmul(w2_oihw), "b2": b2,
        "wfc": wfc, "bfc": bfc,
    }


def prepare_kernel_params(params):
    """Pad / permute / cast raw params into kernel-ready tensors (done once).

    * w1 becomes one (128, 128) matmul weight (75 real K rows, 16 real cols),
    * w2 is tap-packed along K: rows (t*16 + ic) -> (256, 128) so conv2 is a
      single K=256 contraction,
    * wfc rows are regrouped per pooled position j into 128-wide lane blocks
      (kernel gather order) from PyTorch's NCHW flatten order (c*4 + j),
    * MXU operands are cast to bf16; biases stay f32 (f32 accumulators).
    """
    lanes = _LANES
    w1, b1 = params["w1"], params["b1"]          # (75, 16), (16,)
    w2, b2 = params["w2"], params["b2"]          # (144, 32), (32,)
    wfc, bfc = params["wfc"], params["bfc"]      # (128, out_dim), (out_dim,)

    w1p = jnp.pad(w1, ((0, lanes - w1.shape[0]), (0, lanes - w1.shape[1])))

    k2p = 2 * lanes
    w2p = jnp.pad(w2, ((0, k2p - w2.shape[0]), (0, lanes - w2.shape[1])))

    flat, out_dim = wfc.shape
    c2 = w2.shape[1]
    pp = flat // c2                               # pooled positions per batch (4)
    wfc_k = jnp.zeros((pp * lanes, lanes), jnp.float32)
    for j in range(pp):
        rows = jnp.arange(c2) * pp + j            # NCHW flatten index c*pp + j
        wfc_k = wfc_k.at[j * lanes:j * lanes + c2, :out_dim].set(wfc[rows, :])

    return {
        "w1": w1p.astype(_MXU_DTYPE),
        "b1": jnp.pad(b1, (0, lanes - b1.shape[0])).reshape(1, lanes).astype(jnp.float32),
        "w2": w2p.astype(_MXU_DTYPE),
        "b2": jnp.pad(b2, (0, lanes - b2.shape[0])).reshape(1, lanes).astype(jnp.float32),
        "wfc": wfc_k.astype(_MXU_DTYPE),
        "bfc": jnp.pad(bfc, (0, lanes - out_dim)).reshape(1, lanes).astype(jnp.float32),
    }


# ------------------------------ fused kernel --------------------------------

def build_forward(batch, in_image_dim, out_dim):
    """Return a jitted forward(x_nchw, kernel_params) using one fused Pallas kernel."""
    H = W = in_image_dim
    C0, C1, C2 = 3, 16, 32
    K1, K2 = 5, 3
    OH1 = H - K1 + 1              # 12
    PH1 = OH1 // 2                # 6
    OH2 = PH1 - K2 + 1            # 4
    PH2 = OH2 // 2                # 2
    assert OH1 % 2 == 0 and OH2 % 2 == 0, "maxpool assumes even spatial dims"

    LANES = _LANES
    MP = 8                                        # FC rows padded to a sublane tile
    assert batch <= MP
    NPB = PH1 * PH1                               # pooled positions per batch (36)
    NB = batch * NPB                              # compact pool1 grid rows (72)
    assert NB % 8 == 0
    K1P = LANES                                   # conv1 contraction (75 -> 128)
    assert K1 * K1 * C0 <= K1P
    K2P = 2 * LANES                               # conv2 contraction (144 -> 256)
    assert K2 * K2 * C1 <= K2P
    PP = PH2 * PH2                                # pool2 positions per batch (4)
    KFC = PP * LANES                              # FC contraction (512)
    assert C2 * PP <= KFC and out_dim <= LANES
    MAXOFF2 = (K2 - 1) * PH1 + (K2 - 1)           # largest conv2 tap row offset (14)
    R1 = -(-(NB + MAXOFF2) // 8) * 8              # p1c rows incl. shift headroom (88)
    A2R = -(-(NB + PH1 + 2) // 8) * 8             # a2 rows incl. pool2 headroom (80)

    taps2 = tuple((t // K2) * PH1 + (t % K2) for t in range(K2 * K2))
    fc_srcs = tuple(2 * qh * PH1 + 2 * qw for qh in range(PH2) for qw in range(PH2))

    def kernel(x_ref, w1_ref, b1_ref, w2_ref, b2_ref, wfc_ref, bfc_ref,
               out_ref, p1c, l2, a2, p2s, fcb):
        f32 = jnp.float32

        # ---- conv1 + bias + ReLU fused with maxpool1 -----------------------
        # Wrapper row order groups the 4 pool-window positions into 4
        # contiguous NB-row blocks: one full-K dot per block, running max =
        # pool1 + compaction onto the dense (b, ph, pw) grid.
        w1v = w1_ref[...]
        b1v = b1_ref[...]
        p1 = None
        for s in range(4):
            acc = jnp.dot(x_ref[s * NB:(s + 1) * NB, :], w1v,
                          preferred_element_type=f32)
            blk = jnp.maximum(acc + b1v, 0.0)
            p1 = blk if p1 is None else jnp.maximum(p1, blk)
        p1c[0:NB, :] = p1
        # zero the shift headroom read only on behalf of invalid conv2 rows
        p1c[NB:R1, :] = jnp.zeros((R1 - NB, LANES), f32)

        # ---- conv2: pack 9 taps x 16 channels into one K=256 contraction ----
        l2[...] = jnp.zeros((NB, K2P), f32)          # zeros in padding lanes 144:256
        for t, off in enumerate(taps2):
            l2[0:NB, t * C1:(t + 1) * C1] = p1c[off:off + NB, 0:C1]
        a2v = jnp.dot(l2[...].astype(_MXU_DTYPE), w2_ref[...],
                      preferred_element_type=f32)
        a2[0:NB, :] = jnp.maximum(a2v + b2_ref[...], 0.0)
        a2[NB:A2R, :] = jnp.zeros((A2R - NB, LANES), f32)

        # ---- maxpool2 on the compact 6x6 grid (valid at even (h, w) rows) ----
        p2s[...] = jnp.maximum(
            jnp.maximum(a2[0:NB, :], a2[1:NB + 1, :]),
            jnp.maximum(a2[PH1:NB + PH1, :], a2[PH1 + 1:NB + PH1 + 1, :]))

        # ---- FC: 128-lane-aligned row copies into an (8, 512) slab, one dot ----
        fcb[...] = jnp.zeros((MP, KFC), f32)
        for b in range(batch):
            base = b * NPB
            for j, src in enumerate(fc_srcs):
                fcb[b:b + 1, j * LANES:(j + 1) * LANES] = \
                    p2s[base + src:base + src + 1, :]
        out_ref[...] = (jnp.dot(fcb[...].astype(_MXU_DTYPE), wfc_ref[...],
                                preferred_element_type=f32) + bfc_ref[...])

    fused = pl.pallas_call(
        kernel,
        out_shape=jax.ShapeDtypeStruct((MP, LANES), jnp.float32),
        grid=(1,),
        in_specs=[
            pl.BlockSpec((4 * NB, K1P), lambda i: (0, 0)),   # x (im2col, bf16)
            pl.BlockSpec((K1P, LANES), lambda i: (0, 0)),    # w1
            pl.BlockSpec((1, LANES), lambda i: (0, 0)),      # b1
            pl.BlockSpec((K2P, LANES), lambda i: (0, 0)),    # w2 (tap-packed)
            pl.BlockSpec((1, LANES), lambda i: (0, 0)),      # b2
            pl.BlockSpec((KFC, LANES), lambda i: (0, 0)),    # wfc (position blocks)
            pl.BlockSpec((1, LANES), lambda i: (0, 0)),      # bfc
        ],
        out_specs=pl.BlockSpec((MP, LANES), lambda i: (0, 0)),
        scratch_shapes=[
            pltpu.VMEM((R1, LANES), jnp.float32),    # p1c: compact pool1 grid
            pltpu.VMEM((NB, K2P), jnp.float32),      # l2 : packed conv2 LHS
            pltpu.VMEM((A2R, LANES), jnp.float32),   # a2 : conv2 + ReLU
            pltpu.VMEM((NB, LANES), jnp.float32),    # p2s: pool2 grid
            pltpu.VMEM((MP, KFC), jnp.float32),      # fcb: FC LHS slab
        ],
        compiler_params=pltpu.CompilerParams(
            dimension_semantics=("arbitrary",)),
    )
    # TODO(synk): at larger batch/H/W, split rows over a 2-wide "parallel" grid
    # axis (2nd v7x TensorCore) and pipeline the x DMA; at this toy size the
    # kernel is overhead-bound and a single grid step suffices.

    def forward(x_nchw, kp):
        x = jnp.transpose(x_nchw, (0, 2, 3, 1)).astype(jnp.float32)   # -> NHWC
        # conv1 im2col with rows ordered (pool-window s, b, ph, pw): pure
        # layout plumbing, gives the kernel a lane-dense (4*NB, 128) LHS and
        # makes pool1 a contiguous-block max.
        blocks = []
        for di in range(2):
            for dj in range(2):
                patches = []
                for ki in range(K1):
                    for kj in range(K1):
                        patches.append(
                            x[:, di + ki:di + ki + 2 * PH1:2,
                              dj + kj:dj + kj + 2 * PH1:2, :])        # (B,PH1,PH1,C0)
                blk = jnp.stack(patches, axis=3)                      # (B,PH1,PH1,25,C0)
                blocks.append(blk.reshape(batch * NPB, K1 * K1 * C0))
        xm = jnp.concatenate(blocks, axis=0)                          # (4*NB, 75)
        xm = jnp.pad(xm, ((0, 0), (0, K1P - K1 * K1 * C0))).astype(_MXU_DTYPE)
        out = fused(xm, kp["w1"], kp["b1"], kp["w2"], kp["b2"],
                    kp["wfc"], kp["bfc"])
        return out[:batch, :out_dim]

    return jax.jit(forward)


# --------------------------- pure-JAX reference ------------------------------

def reference_forward(x_nchw, params):
    """Pure-JAX f32 reference with identical forward semantics (validation only)."""
    x = jnp.transpose(x_nchw, (0, 2, 3, 1)).astype(jnp.float32)

    def conv_relu(x, w_mat, b, k):
        B, H, W, C = x.shape
        oh, ow = H - k + 1, W - k + 1
        cols = [x[:, i:i + oh, j:j + ow, :] for i in range(k) for j in range(k)]
        p = jnp.stack(cols, axis=3).reshape(B * oh * ow, k * k * C)
        return jnp.maximum(p @ w_mat + b, 0.0).reshape(B, oh, ow, -1)

    def pool(x):
        return jnp.maximum(jnp.maximum(x[:, 0::2, 0::2, :], x[:, 0::2, 1::2, :]),
                           jnp.maximum(x[:, 1::2, 0::2, :], x[:, 1::2, 1::2, :]))

    y = pool(conv_relu(x, params["w1"], params["b1"], 5))
    y = pool(conv_relu(y, params["w2"], params["b2"], 3))
    B = y.shape[0]
    flat = jnp.transpose(y, (0, 3, 1, 2)).reshape(B, -1)   # PyTorch NCHW flatten
    return flat @ params["wfc"] + params["bfc"]


if __name__ == "__main__":
    in_image_dim = 16
    characteristic_dim = 32
    batch = 2
    out_dim = characteristic_dim - 5

    key = jax.random.PRNGKey(0)
    k_x, k_p = jax.random.split(key)
    x = jax.random.normal(k_x, (batch, 3, in_image_dim, in_image_dim), jnp.float32)
    params = init_params(k_p, in_image_dim, characteristic_dim)
    kparams = prepare_kernel_params(params)

    forward = build_forward(batch, in_image_dim, out_dim)
    y = forward(x, kparams)
    jax.block_until_ready(y)
    assert y.shape == (batch, out_dim), y.shape

    # loose-tolerance check vs the f32 reference (kernel uses bf16 MXU operands)
    y_ref = reference_forward(x, params)
    err = float(jnp.max(jnp.abs(y - y_ref)))
    scale = float(jnp.max(jnp.abs(y_ref)))
    assert err <= 0.05 * scale + 0.05, f"mismatch: max abs err {err} (scale {scale})"

    print("KERNEL_OK")
</pallas_src>

<mosaic_0001>
module attributes {stable_mosaic.version = 11 : i64} {
  func.func @kernel(%arg0: i32, %arg1: memref<288x128xbf16, #tpu.memory_space<vmem>>, %arg2: memref<128x128xbf16, #tpu.memory_space<vmem>>, %arg3: memref<1x128xf32, #tpu.memory_space<vmem>>, %arg4: memref<256x128xbf16, #tpu.memory_space<vmem>>, %arg5: memref<1x128xf32, #tpu.memory_space<vmem>>, %arg6: memref<512x128xbf16, #tpu.memory_space<vmem>>, %arg7: memref<1x128xf32, #tpu.memory_space<vmem>>, %arg8: memref<8x128xf32, #tpu.memory_space<vmem>>, %arg9: memref<88x128xf32, #tpu.memory_space<vmem>>, %arg10: memref<72x256xf32, #tpu.memory_space<vmem>>, %arg11: memref<80x128xf32, #tpu.memory_space<vmem>>, %arg12: memref<72x128xf32, #tpu.memory_space<vmem>>, %arg13: memref<8x512xf32, #tpu.memory_space<vmem>>) attributes {dimension_semantics = [#tpu.dimension_semantics<arbitrary>], iteration_bounds = array<i64: 1>, scalar_prefetch = 0 : i64, scratch_operands = 5 : i64, tpu.core_type = #tpu.core_type<tc>, window_params = [{pipeline_mode = #tpu.pipeline_mode<synchronous>, transform_indices = @transform_0, window_bounds = array<i64: 288, 128>}, {pipeline_mode = #tpu.pipeline_mode<synchronous>, transform_indices = @transform_1, window_bounds = array<i64: 128, 128>}, {pipeline_mode = #tpu.pipeline_mode<synchronous>, transform_indices = @transform_2, window_bounds = array<i64: 1, 128>}, {pipeline_mode = #tpu.pipeline_mode<synchronous>, transform_indices = @transform_3, window_bounds = array<i64: 256, 128>}, {pipeline_mode = #tpu.pipeline_mode<synchronous>, transform_indices = @transform_4, window_bounds = array<i64: 1, 128>}, {pipeline_mode = #tpu.pipeline_mode<synchronous>, transform_indices = @transform_5, window_bounds = array<i64: 512, 128>}, {pipeline_mode = #tpu.pipeline_mode<synchronous>, transform_indices = @transform_6, window_bounds = array<i64: 1, 128>}, {pipeline_mode = #tpu.pipeline_mode<synchronous>, transform_indices = @transform_7, window_bounds = array<i64: 8, 128>}]} {
    %c0 = arith.constant 0 : index
    %c0_0 = arith.constant 0 : index
    %0 = vector.load %arg2[%c0, %c0_0] : memref<128x128xbf16, #tpu.memory_space<vmem>>, vector<128x128xbf16>
    %c0_1 = arith.constant 0 : index
    %c0_2 = arith.constant 0 : index
    %1 = vector.load %arg3[%c0_1, %c0_2] : memref<1x128xf32, #tpu.memory_space<vmem>>, vector<1x128xf32>
    %c0_3 = arith.constant 0 : index
    %c0_4 = arith.constant 0 : index
    %2 = vector.load %arg1[%c0_3, %c0_4] : memref<288x128xbf16, #tpu.memory_space<vmem>>, vector<72x128xbf16>
    %cst = arith.constant dense<0.000000e+00> : vector<72x128xf32>
    %3 = tpu.matmul %2, %0, %cst {dimension_numbers = #tpu.dot_dimension_numbers<[1], [0], [0], [1], [0, 0, 1, 1], [], []>} : vector<72x128xbf16>, vector<128x128xbf16>, vector<72x128xf32> -> vector<72x128xf32>
    %4 = vector.broadcast %1 : vector<1x128xf32> to vector<72x128xf32>
    %5 = arith.addf %3, %4 : vector<72x128xf32>
    %cst_5 = arith.constant 0.000000e+00 : f32
    %6 = vector.broadcast %cst_5 : f32 to vector<72x128xf32>
    %7 = arith.maximumf %5, %6 : vector<72x128xf32>
    %c72 = arith.constant 72 : index
    %c0_6 = arith.constant 0 : index
    %8 = vector.load %arg1[%c72, %c0_6] : memref<288x128xbf16, #tpu.memory_space<vmem>>, vector<72x128xbf16>
    %cst_7 = arith.constant dense<0.000000e+00> : vector<72x128xf32>
    %9 = tpu.matmul %8, %0, %cst_7 {dimension_numbers = #tpu.dot_dimension_numbers<[1], [0], [0], [1], [0, 0, 1, 1], [], []>} : vector<72x128xbf16>, vector<128x128xbf16>, vector<72x128xf32> -> vector<72x128xf32>
    %10 = vector.broadcast %1 : vector<1x128xf32> to vector<72x128xf32>
    %11 = arith.addf %9, %10 : vector<72x128xf32>
    %cst_8 = arith.constant 0.000000e+00 : f32
    %12 = vector.broadcast %cst_8 : f32 to vector<72x128xf32>
    %13 = arith.maximumf %11, %12 : vector<72x128xf32>
    %14 = arith.maximumf %7, %13 : vector<72x128xf32>
    %c144 = arith.constant 144 : index
    %c0_9 = arith.constant 0 : index
    %15 = vector.load %arg1[%c144, %c0_9] : memref<288x128xbf16, #tpu.memory_space<vmem>>, vector<72x128xbf16>
    %cst_10 = arith.constant dense<0.000000e+00> : vector<72x128xf32>
    %16 = tpu.matmul %15, %0, %cst_10 {dimension_numbers = #tpu.dot_dimension_numbers<[1], [0], [0], [1], [0, 0, 1, 1], [], []>} : vector<72x128xbf16>, vector<128x128xbf16>, vector<72x128xf32> -> vector<72x128xf32>
    %17 = vector.broadcast %1 : vector<1x128xf32> to vector<72x128xf32>
    %18 = arith.addf %16, %17 : vector<72x128xf32>
    %cst_11 = arith.constant 0.000000e+00 : f32
    %19 = vector.broadcast %cst_11 : f32 to vector<72x128xf32>
    %20 = arith.maximumf %18, %19 : vector<72x128xf32>
    %21 = arith.maximumf %14, %20 : vector<72x128xf32>
    %c216 = arith.constant 216 : index
    %c0_12 = arith.constant 0 : index
    %22 = vector.load %arg1[%c216, %c0_12] : memref<288x128xbf16, #tpu.memory_space<vmem>>, vector<72x128xbf16>
    %cst_13 = arith.constant dense<0.000000e+00> : vector<72x128xf32>
    %23 = tpu.matmul %22, %0, %cst_13 {dimension_numbers = #tpu.dot_dimension_numbers<[1], [0], [0], [1], [0, 0, 1, 1], [], []>} : vector<72x128xbf16>, vector<128x128xbf16>, vector<72x128xf32> -> vector<72x128xf32>
    %24 = vector.broadcast %1 : vector<1x128xf32> to vector<72x128xf32>
    %25 = arith.addf %23, %24 : vector<72x128xf32>
    %cst_14 = arith.constant 0.000000e+00 : f32
    %26 = vector.broadcast %cst_14 : f32 to vector<72x128xf32>
    %27 = arith.maximumf %25, %26 : vector<72x128xf32>
    %28 = arith.maximumf %21, %27 : vector<72x128xf32>
    %c0_15 = arith.constant 0 : index
    %c0_16 = arith.constant 0 : index
    %29 = vector.load %arg9[%c0_15, %c0_16] : memref<88x128xf32, #tpu.memory_space<vmem>>, vector<72x128xf32>
    tpu.vector_store %arg9[%c0_15, %c0_16], %28 {strides = array<i32>} : memref<88x128xf32, #tpu.memory_space<vmem>>, vector<72x128xf32>,
    %cst_17 = arith.constant 0.000000e+00 : f32
    %30 = vector.broadcast %cst_17 : f32 to vector<16x128xf32>
    %c72_18 = arith.constant 72 : index
    %c0_19 = arith.constant 0 : index
    %31 = vector.load %arg9[%c72_18, %c0_19] : memref<88x128xf32, #tpu.memory_space<vmem>>, vector<16x128xf32>
    tpu.vector_store %arg9[%c72_18, %c0_19], %30 {strides = array<i32>} : memref<88x128xf32, #tpu.memory_space<vmem>>, vector<16x128xf32>,
    %cst_20 = arith.constant 0.000000e+00 : f32
    %32 = vector.broadcast %cst_20 : f32 to vector<72x256xf32>
    %c0_21 = arith.constant 0 : index
    %c0_22 = arith.constant 0 : index
    %33 = vector.load %arg10[%c0_21, %c0_22] : memref<72x256xf32, #tpu.memory_space<vmem>>, vector<72x256xf32>
    tpu.vector_store %arg10[%c0_21, %c0_22], %32 {strides = array<i32>} : memref<72x256xf32, #tpu.memory_space<vmem>>, vector<72x256xf32>,
    %c0_23 = arith.constant 0 : index
    %c0_24 = arith.constant 0 : index
    %34 = vector.load %arg9[%c0_23, %c0_24] : memref<88x128xf32, #tpu.memory_space<vmem>>, vector<72x16xf32>
    %c0_25 = arith.constant 0 : index
    %c0_26 = arith.constant 0 : index
    %35 = vector.load %arg10[%c0_25, %c0_26] : memref<72x256xf32, #tpu.memory_space<vmem>>, vector<72x16xf32>
    tpu.vector_store %arg10[%c0_25, %c0_26], %34 {strides = array<i32>} : memref<72x256xf32, #tpu.memory_space<vmem>>, vector<72x16xf32>,
    %c1 = arith.constant 1 : index
    %c0_27 = arith.constant 0 : index
    %36 = vector.load %arg9[%c1, %c0_27] : memref<88x128xf32, #tpu.memory_space<vmem>>, vector<72x16xf32>
    %c0_28 = arith.constant 0 : index
    %c16 = arith.constant 16 : index
    %37 = vector.load %arg10[%c0_28, %c16] : memref<72x256xf32, #tpu.memory_space<vmem>>, vector<72x16xf32>
    tpu.vector_store %arg10[%c0_28, %c16], %36 {strides = array<i32>} : memref<72x256xf32, #tpu.memory_space<vmem>>, vector<72x16xf32>,
    %c2 = arith.constant 2 : index
    %c0_29 = arith.constant 0 : index
    %38 = vector.load %arg9[%c2, %c0_29] : memref<88x128xf32, #tpu.memory_space<vmem>>, vector<72x16xf32>
    %c0_30 = arith.constant 0 : index
    %c32 = arith.constant 32 : index
    %39 = vector.load %arg10[%c0_30, %c32] : memref<72x256xf32, #tpu.memory_space<vmem>>, vector<72x16xf32>
    tpu.vector_store %arg10[%c0_30, %c32], %38 {strides = array<i32>} : memref<72x256xf32, #tpu.memory_space<vmem>>, vector<72x16xf32>,
    %c6 = arith.constant 6 : index
    %c0_31 = arith.constant 0 : index
    %40 = vector.load %arg9[%c6, %c0_31] : memref<88x128xf32, #tpu.memory_space<vmem>>, vector<72x16xf32>
    %c0_32 = arith.constant 0 : index
    %c48 = arith.constant 48 : index
    %41 = vector.load %arg10[%c0_32, %c48] : memref<72x256xf32, #tpu.memory_space<vmem>>, vector<72x16xf32>
    tpu.vector_store %arg10[%c0_32, %c48], %40 {strides = array<i32>} : memref<72x256xf32, #tpu.memory_space<vmem>>, vector<72x16xf32>,
    %c7 = arith.constant 7 : index
    %c0_33 = arith.constant 0 : index
    %42 = vector.load %arg9[%c7, %c0_33] : memref<88x128xf32, #tpu.memory_space<vmem>>, vector<72x16xf32>
    %c0_34 = arith.constant 0 : index
    %c64 = arith.constant 64 : index
    %43 = vector.load %arg10[%c0_34, %c64] : memref<72x256xf32, #tpu.memory_space<vmem>>, vector<72x16xf32>
    tpu.vector_store %arg10[%c0_34, %c64], %42 {strides = array<i32>} : memref<72x256xf32, #tpu.memory_space<vmem>>, vector<72x16xf32>,
    %c8 = arith.constant 8 : index
    %c0_35 = arith.constant 0 : index
    %44 = vector.load %arg9[%c8, %c0_35] : memref<88x128xf32, #tpu.memory_space<vmem>>, vector<72x16xf32>
    %c0_36 = arith.constant 0 : index
    %c80 = arith.constant 80 : index
    %45 = vector.load %arg10[%c0_36, %c80] : memref<72x256xf32, #tpu.memory_space<vmem>>, vector<72x16xf32>
    tpu.vector_store %arg10[%c0_36, %c80], %44 {strides = array<i32>} : memref<72x256xf32, #tpu.memory_space<vmem>>, vector<72x16xf32>,
    %c12 = arith.constant 12 : index
    %c0_37 = arith.constant 0 : index
    %46 = vector.load %arg9[%c12, %c0_37] : memref<88x128xf32, #tpu.memory_space<vmem>>, vector<72x16xf32>
    %c0_38 = arith.constant 0 : index
    %c96 = arith.constant 96 : index
    %47 = vector.load %arg10[%c0_38, %c96] : memref<72x256xf32, #tpu.memory_space<vmem>>, vector<72x16xf32>
    tpu.vector_store %arg10[%c0_38, %c96], %46 {strides = array<i32>} : memref<72x256xf32, #tpu.memory_space<vmem>>, vector<72x16xf32>,
    %c13 = arith.constant 13 : index
    %c0_39 = arith.constant 0 : index
    %48 = vector.load %arg9[%c13, %c0_39] : memref<88x128xf32, #tpu.memory_space<vmem>>, vector<72x16xf32>
    %c0_40 = arith.constant 0 : index
    %c112 = arith.constant 112 : index
    %49 = vector.load %arg10[%c0_40, %c112] : memref<72x256xf32, #tpu.memory_space<vmem>>, vector<72x16xf32>
    tpu.vector_store %arg10[%c0_40, %c112], %48 {strides = array<i32>} : memref<72x256xf32, #tpu.memory_space<vmem>>, vector<72x16xf32>,
    %c14 = arith.constant 14 : index
    %c0_41 = arith.constant 0 : index
    %50 = vector.load %arg9[%c14, %c0_41] : memref<88x128xf32, #tpu.memory_space<vmem>>, vector<72x16xf32>
    %c0_42 = arith.constant 0 : index
    %c128 = arith.constant 128 : index
    %51 = vector.load %arg10[%c0_42, %c128] : memref<72x256xf32, #tpu.memory_space<vmem>>, vector<72x16xf32>
    tpu.vector_store %arg10[%c0_42, %c128], %50 {strides = array<i32>} : memref<72x256xf32, #tpu.memory_space<vmem>>, vector<72x16xf32>,
    %c0_43 = arith.constant 0 : index
    %c0_44 = arith.constant 0 : index
    %52 = vector.load %arg10[%c0_43, %c0_44] : memref<72x256xf32, #tpu.memory_space<vmem>>, vector<72x256xf32>
    %53 = arith.truncf %52 : vector<72x256xf32> to vector<72x256xbf16>
    %c0_45 = arith.constant 0 : index
    %c0_46 = arith.constant 0 : index
    %54 = vector.load %arg4[%c0_45, %c0_46] : memref<256x128xbf16, #tpu.memory_space<vmem>>, vector<256x128xbf16>
    %cst_47 = arith.constant dense<0.000000e+00> : vector<72x128xf32>
    %55 = tpu.matmul %53, %54, %cst_47 {dimension_numbers = #tpu.dot_dimension_numbers<[1], [0], [0], [1], [0, 0, 1, 1], [], []>} : vector<72x256xbf16>, vector<256x128xbf16>, vector<72x128xf32> -> vector<72x128xf32>
    %c0_48 = arith.constant 0 : index
    %c0_49 = arith.constant 0 : index
    %56 = vector.load %arg5[%c0_48, %c0_49] : memref<1x128xf32, #tpu.memory_space<vmem>>, vector<1x128xf32>
    %57 = vector.broadcast %56 : vector<1x128xf32> to vector<72x128xf32>
    %58 = arith.addf %55, %57 : vector<72x128xf32>
    %cst_50 = arith.constant 0.000000e+00 : f32
    %59 = vector.broadcast %cst_50 : f32 to vector<72x128xf32>
    %60 = arith.maximumf %58, %59 : vector<72x128xf32>
    %c0_51 = arith.constant 0 : index
    %c0_52 = arith.constant 0 : index
    %61 = vector.load %arg11[%c0_51, %c0_52] : memref<80x128xf32, #tpu.memory_space<vmem>>, vector<72x128xf32>
    tpu.vector_store %arg11[%c0_51, %c0_52], %60 {strides = array<i32>} : memref<80x128xf32, #tpu.memory_space<vmem>>, vector<72x128xf32>,
    %cst_53 = arith.constant 0.000000e+00 : f32
    %62 = vector.broadcast %cst_53 : f32 to vector<8x128xf32>
    %c72_54 = arith.constant 72 : index
    %c0_55 = arith.constant 0 : index
    %63 = vector.load %arg11[%c72_54, %c0_55] : memref<80x128xf32, #tpu.memory_space<vmem>>, vector<8x128xf32>
    tpu.vector_store %arg11[%c72_54, %c0_55], %62 {strides = array<i32>} : memref<80x128xf32, #tpu.memory_space<vmem>>, vector<8x128xf32>,
    %c0_56 = arith.constant 0 : index
    %c0_57 = arith.constant 0 : index
    %64 = vector.load %arg11[%c0_56, %c0_57] : memref<80x128xf32, #tpu.memory_space<vmem>>, vector<72x128xf32>
    %c1_58 = arith.constant 1 : index
    %c0_59 = arith.constant 0 : index
    %65 = vector.load %arg11[%c1_58, %c0_59] : memref<80x128xf32, #tpu.memory_space<vmem>>, vector<72x128xf32>
    %66 = arith.maximumf %64, %65 : vector<72x128xf32>
    %c6_60 = arith.constant 6 : index
    %c0_61 = arith.constant 0 : index
    %67 = vector.load %arg11[%c6_60, %c0_61] : memref<80x128xf32, #tpu.memory_space<vmem>>, vector<72x128xf32>
    %c7_62 = arith.constant 7 : index
    %c0_63 = arith.constant 0 : index
    %68 = vector.load %arg11[%c7_62, %c0_63] : memref<80x128xf32, #tpu.memory_space<vmem>>, vector<72x128xf32>
    %69 = arith.maximumf %67, %68 : vector<72x128xf32>
    %70 = arith.maximumf %66, %69 : vector<72x128xf32>
    %c0_64 = arith.constant 0 : index
    %c0_65 = arith.constant 0 : index
    %71 = vector.load %arg12[%c0_64, %c0_65] : memref<72x128xf32, #tpu.memory_space<vmem>>, vector<72x128xf32>
    tpu.vector_store %arg12[%c0_64, %c0_65], %70 {strides = array<i32>} : memref<72x128xf32, #tpu.memory_space<vmem>>, vector<72x128xf32>,
    %cst_66 = arith.constant 0.000000e+00 : f32
    %72 = vector.broadcast %cst_66 : f32 to vector<8x512xf32>
    %c0_67 = arith.constant 0 : index
    %c0_68 = arith.constant 0 : index
    %73 = vector.load %arg13[%c0_67, %c0_68] : memref<8x512xf32, #tpu.memory_space<vmem>>, vector<8x512xf32>
    tpu.vector_store %arg13[%c0_67, %c0_68], %72 {strides = array<i32>} : memref<8x512xf32, #tpu.memory_space<vmem>>, vector<8x512xf32>,
    %c0_69 = arith.constant 0 : index
    %c0_70 = arith.constant 0 : index
    %74 = vector.load %arg12[%c0_69, %c0_70] : memref<72x128xf32, #tpu.memory_space<vmem>>, vector<1x128xf32>
    %c0_71 = arith.constant 0 : index
    %c0_72 = arith.constant 0 : index
    %75 = vector.load %arg13[%c0_71, %c0_72] : memref<8x512xf32, #tpu.memory_space<vmem>>, vector<1x128xf32>
    tpu.vector_store %arg13[%c0_71, %c0_72], %74 {strides = array<i32>} : memref<8x512xf32, #tpu.memory_space<vmem>>, vector<1x128xf32>,
    %c2_73 = arith.constant 2 : index
    %c0_74 = arith.constant 0 : index
    %76 = vector.load %arg12[%c2_73, %c0_74] : memref<72x128xf32, #tpu.memory_space<vmem>>, vector<1x128xf32>
    %c0_75 = arith.constant 0 : index
    %c128_76 = arith.constant 128 : index
    %77 = vector.load %arg13[%c0_75, %c128_76] : memref<8x512xf32, #tpu.memory_space<vmem>>, vector<1x128xf32>
    tpu.vector_store %arg13[%c0_75, %c128_76], %76 {strides = array<i32>} : memref<8x512xf32, #tpu.memory_space<vmem>>, vector<1x128xf32>,
    %c12_77 = arith.constant 12 : index
    %c0_78 = arith.constant 0 : index
    %78 = vector.load %arg12[%c12_77, %c0_78] : memref<72x128xf32, #tpu.memory_space<vmem>>, vector<1x128xf32>
    %c0_79 = arith.constant 0 : index
    %c256 = arith.constant 256 : index
    %79 = vector.load %arg13[%c0_79, %c256] : memref<8x512xf32, #tpu.memory_space<vmem>>, vector<1x128xf32>
    tpu.vector_store %arg13[%c0_79, %c256], %78 {strides = array<i32>} : memref<8x512xf32, #tpu.memory_space<vmem>>, vector<1x128xf32>,
    %c14_80 = arith.constant 14 : index
    %c0_81 = arith.constant 0 : index
    %80 = vector.load %arg12[%c14_80, %c0_81] : memref<72x128xf32, #tpu.memory_space<vmem>>, vector<1x128xf32>
    %c0_82 = arith.constant 0 : index
    %c384 = arith.constant 384 : index
    %81 = vector.load %arg13[%c0_82, %c384] : memref<8x512xf32, #tpu.memory_space<vmem>>, vector<1x128xf32>
    tpu.vector_store %arg13[%c0_82, %c384], %80 {strides = array<i32>} : memref<8x512xf32, #tpu.memory_space<vmem>>, vector<1x128xf32>,
    %c36 = arith.constant 36 : index
    %c0_83 = arith.constant 0 : index
    %82 = vector.load %arg12[%c36, %c0_83] : memref<72x128xf32, #tpu.memory_space<vmem>>, vector<1x128xf32>
    %c1_84 = arith.constant 1 : index
    %c0_85 = arith.constant 0 : index
    %83 = vector.load %arg13[%c1_84, %c0_85] : memref<8x512xf32, #tpu.memory_space<vmem>>, vector<1x128xf32>
    tpu.vector_store %arg13[%c1_84, %c0_85], %82 {strides = array<i32>} : memref<8x512xf32, #tpu.memory_space<vmem>>, vector<1x128xf32>,
    %c38 = arith.constant 38 : index
    %c0_86 = arith.constant 0 : index
    %84 = vector.load %arg12[%c38, %c0_86] : memref<72x128xf32, #tpu.memory_space<vmem>>, vector<1x128xf32>
    %c1_87 = arith.constant 1 : index
    %c128_88 = arith.constant 128 : index
    %85 = vector.load %arg13[%c1_87, %c128_88] : memref<8x512xf32, #tpu.memory_space<vmem>>, vector<1x128xf32>
    tpu.vector_store %arg13[%c1_87, %c128_88], %84 {strides = array<i32>} : memref<8x512xf32, #tpu.memory_space<vmem>>, vector<1x128xf32>,
    %c48_89 = arith.constant 48 : index
    %c0_90 = arith.constant 0 : index
    %86 = vector.load %arg12[%c48_89, %c0_90] : memref<72x128xf32, #tpu.memory_space<vmem>>, vector<1x128xf32>
    %c1_91 = arith.constant 1 : index
    %c256_92 = arith.constant 256 : index
    %87 = vector.load %arg13[%c1_91, %c256_92] : memref<8x512xf32, #tpu.memory_space<vmem>>, vector<1x128xf32>
    tpu.vector_store %arg13[%c1_91, %c256_92], %86 {strides = array<i32>} : memref<8x512xf32, #tpu.memory_space<vmem>>, vector<1x128xf32>,
    %c50 = arith.constant 50 : index
    %c0_93 = arith.constant 0 : index
    %88 = vector.load %arg12[%c50, %c0_93] : memref<72x128xf32, #tpu.memory_space<vmem>>, vector<1x128xf32>
    %c1_94 = arith.constant 1 : index
    %c384_95 = arith.constant 384 : index
    %89 = vector.load %arg13[%c1_94, %c384_95] : memref<8x512xf32, #tpu.memory_space<vmem>>, vector<1x128xf32>
    tpu.vector_store %arg13[%c1_94, %c384_95], %88 {strides = array<i32>} : memref<8x512xf32, #tpu.memory_space<vmem>>, vector<1x128xf32>,
    %c0_96 = arith.constant 0 : index
    %c0_97 = arith.constant 0 : index
    %90 = vector.load %arg13[%c0_96, %c0_97] : memref<8x512xf32, #tpu.memory_space<vmem>>, vector<8x512xf32>
    %91 = arith.truncf %90 : vector<8x512xf32> to vector<8x512xbf16>
    %c0_98 = arith.constant 0 : index
    %c0_99 = arith.constant 0 : index
    %92 = vector.load %arg6[%c0_98, %c0_99] : memref<512x128xbf16, #tpu.memory_space<vmem>>, vector<512x128xbf16>
    %cst_100 = arith.constant dense<0.000000e+00> : vector<8x128xf32>
    %93 = tpu.matmul %91, %92, %cst_100 {dimension_numbers = #tpu.dot_dimension_numbers<[1], [0], [0], [1], [0, 0, 1, 1], [], []>} : vector<8x512xbf16>, vector<512x128xbf16>, vector<8x128xf32> -> vector<8x128xf32>
    %c0_101 = arith.constant 0 : index
    %c0_102 = arith.constant 0 : index
    %94 = vector.load %arg7[%c0_101, %c0_102] : memref<1x128xf32, #tpu.memory_space<vmem>>, vector<1x128xf32>
    %95 = vector.broadcast %94 : vector<1x128xf32> to vector<8x128xf32>
    %96 = arith.addf %93, %95 : vector<8x128xf32>
    %c0_103 = arith.constant 0 : index
    %c0_104 = arith.constant 0 : index
    %97 = vector.load %arg8[%c0_103, %c0_104] : memref<8x128xf32, #tpu.memory_space<vmem>>, vector<8x128xf32>
    tpu.vector_store %arg8[%c0_103, %c0_104], %96 {strides = array<i32>} : memref<8x128xf32, #tpu.memory_space<vmem>>, vector<8x128xf32>,
    return
  }
  func.func @transform_0(%arg0: i32) -> (i32, i32) {
    %c0_i32 = arith.constant 0 : i32
    %c0_i32_0 = arith.constant 0 : i32
    %c0_i32_1 = arith.constant 0 : i32
    return %c0_i32, %c0_i32_0 : i32, i32
  }
  func.func @transform_1(%arg0: i32) -> (i32, i32) {
    %c0_i32 = arith.constant 0 : i32
    %c0_i32_0 = arith.constant 0 : i32
    %c0_i32_1 = arith.constant 0 : i32
    return %c0_i32, %c0_i32_0 : i32, i32
  }
  func.func @transform_2(%arg0: i32) -> (i32, i32) {
    %c0_i32 = arith.constant 0 : i32
    %c0_i32_0 = arith.constant 0 : i32
    %c0_i32_1 = arith.constant 0 : i32
    return %c0_i32, %c0_i32_0 : i32, i32
  }
  func.func @transform_3(%arg0: i32) -> (i32, i32) {
    %c0_i32 = arith.constant 0 : i32
    %c0_i32_0 = arith.constant 0 : i32
    %c0_i32_1 = arith.constant 0 : i32
    return %c0_i32, %c0_i32_0 : i32, i32
  }
  func.func @transform_4(%arg0: i32) -> (i32, i32) {
    %c0_i32 = arith.constant 0 : i32
    %c0_i32_0 = arith.constant 0 : i32
    %c0_i32_1 = arith.constant 0 : i32
    return %c0_i32, %c0_i32_0 : i32, i32
  }
  func.func @transform_5(%arg0: i32) -> (i32, i32) {
    %c0_i32 = arith.constant 0 : i32
    %c0_i32_0 = arith.constant 0 : i32
    %c0_i32_1 = arith.constant 0 : i32
    return %c0_i32, %c0_i32_0 : i32, i32
  }
  func.func @transform_6(%arg0: i32) -> (i32, i32) {
    %c0_i32 = arith.constant 0 : i32
    %c0_i32_0 = arith.constant 0 : i32
    %c0_i32_1 = arith.constant 0 : i32
    return %c0_i32, %c0_i32_0 : i32, i32
  }
  func.func @transform_7(%arg0: i32) -> (i32, i32) {
    %c0_i32 = arith.constant 0 : i32
    %c0_i32_0 = arith.constant 0 : i32
    %c0_i32_1 = arith.constant 0 : i32
    return %c0_i32, %c0_i32_0 : i32, i32
  }
}

</mosaic_0001>

<llo_original>
// kernel: forward.1
$region0: #{forward.1}
  #allocation0 [shape = 'u32[]', space=smem, size = 0x4, offset = 0x4, fixed_abs, tag = 'smem constant byte address 0x4 - core index']
  #allocation1 [shape = 'u32[72,128]{1,0:T(1,128)}', space=vmem, size = 0x9000, scoped, tag = 'internal scratch']
  #allocation2 [shape = 'f32[88,128]{1,0:T(8,128)}', space=vmem, size = 0xb000, scoped, tag = 'scratch operand']
  #allocation3 [shape = 'f32[72,256]{1,0:T(8,128)}', space=vmem, size = 0x12000, scoped, tag = 'scratch operand']
  #allocation4 [shape = 'f32[80,128]{1,0:T(8,128)}', space=vmem, size = 0xa000, scoped, tag = 'scratch operand']
  #allocation5 [shape = 'f32[72,128]{1,0:T(8,128)}', space=vmem, size = 0x9000, scoped, tag = 'scratch operand']
  #allocation6 [shape = 'f32[8,512]{1,0:T(8,128)}', space=vmem, size = 0x4000, scoped, tag = 'scratch operand']
  %s0 = inlined_call_operand.vmem [shape: bf16[288,128], index: 0, kind: input, shape index: {}]
  %s1 = inlined_call_operand.vmem [shape: bf16[128,128], index: 1, kind: input, shape index: {}]
  %s2 = inlined_call_operand.vmem [shape: f32[1,128], index: 2, kind: input, shape index: {}]
  %s3 = inlined_call_operand.vmem [shape: bf16[256,128], index: 3, kind: input, shape index: {}]
  %s4 = inlined_call_operand.vmem [shape: f32[1,128], index: 4, kind: input, shape index: {}]
  %s5 = inlined_call_operand.vmem [shape: bf16[512,128], index: 5, kind: input, shape index: {}]
  %s6 = inlined_call_operand.vmem [shape: f32[1,128], index: 6, kind: input, shape index: {}]
  %s7 = inlined_call_operand.vmem [shape: f32[8,128], index: 7, kind: output, shape index: {}]
  %s8 = sld [smem:[#allocation0]]
  $region38: #{forward.1} parent=0
    _
  %s10 = ssub.s32 1, %s8
  %s11 = scalar_select 0, %s10, %s8
  // Predicated region
  $region2: #{forward.1} parent=0 // pred_check
    _
  $region3: #{forward.1} parent=0 // pred_check_branch
    %13 = sbr.rel (0) target = $region5
  $region4: #{forward.1} parent=0 // pred_region
    _
  $region5: #{forward.1} parent=0 // pred_fallthru
    _
  // Predicated region
  $region6: #{forward.1} parent=0 // pred_check
    _
  $region7: #{forward.1} parent=0 // pred_check_branch
    %15 = sbr.rel (0) target = $region9
  $region8: #{forward.1} parent=0 // pred_region
    _
  $region9: #{forward.1} parent=0 // pred_fallthru
    _
  // Predicated region
  $region10: #{forward.1} parent=0 // pred_check
    _
  $region11: #{forward.1} parent=0 // pred_check_branch
    %17 = sbr.rel (0) target = $region13
  $region12: #{forward.1} parent=0 // pred_region
    _
  $region13: #{forward.1} parent=0 // pred_fallthru
    _
  // Predicated region
  $region14: #{forward.1} parent=0 // pred_check
    _
  $region15: #{forward.1} parent=0 // pred_check_branch
    %19 = sbr.rel (0) target = $region17
  $region16: #{forward.1} parent=0 // pred_region
    _
  $region17: #{forward.1} parent=0 // pred_fallthru
    _
  // Predicated region
  $region18: #{forward.1} parent=0 // pred_check
    _
  $region19: #{forward.1} parent=0 // pred_check_branch
    %21 = sbr.rel (0) target = $region21
  $region20: #{forward.1} parent=0 // pred_region
    _
  $region21: #{forward.1} parent=0 // pred_fallthru
    _
  // Predicated region
  $region22: #{forward.1} parent=0 // pred_check
    _
  $region23: #{forward.1} parent=0 // pred_check_branch
    %23 = sbr.rel (0) target = $region25
  $region24: #{forward.1} parent=0 // pred_region
    _
  $region25: #{forward.1} parent=0 // pred_fallthru
    _
  // Predicated region
  $region26: #{forward.1} parent=0 // pred_check
    _
  $region27: #{forward.1} parent=0 // pred_check_branch
    %25 = sbr.rel (0) target = $region29
  $region28: #{forward.1} parent=0 // pred_region
    _
  $region29: #{forward.1} parent=0 // pred_fallthru
    _
  %v26 = vld [vmem:[%s1] sm:$0xf]
  %v27 = vld [vmem:[%s1 + $0x4] sm:$0xf]
  %v28 = vld [vmem:[%s1 + $0x8] sm:$0xf]
  %v29 = vld [vmem:[%s1 + $0xc] sm:$0xf]
  %v30 = vld [vmem:[%s1 + $0x10] sm:$0xf]
  %v31 = vld [vmem:[%s1 + $0x14] sm:$0xf]
  %v32 = vld [vmem:[%s1 + $0x18] sm:$0xf]
  %v33 = vld [vmem:[%s1 + $0x1c] sm:$0xf]
  %v34 = vld [vmem:[%s1 + $0x20] sm:$0xf]
  %v35 = vld [vmem:[%s1 + $0x24] sm:$0xf]
  %v36 = vld [vmem:[%s1 + $0x28] sm:$0xf]
  %v37 = vld [vmem:[%s1 + $0x2c] sm:$0xf]
  %v38 = vld [vmem:[%s1 + $0x30] sm:$0xf]
  %v39 = vld [vmem:[%s1 + $0x34] sm:$0xf]
  %v40 = vld [vmem:[%s1 + $0x38] sm:$0xf]
  %v41 = vld [vmem:[%s1 + $0x3c] sm:$0xf]
  %v42 = vld [vmem:[%s2] sm:$0x1]
  %v43 = vld [vmem:[%s0] sm:$0xf]
  %v44 = vld [vmem:[%s0 + $0x4] sm:$0xf]
  %v45 = vld [vmem:[%s0 + $0x8] sm:$0xf]
  %v46 = vld [vmem:[%s0 + $0xc] sm:$0xf]
  %v47 = vld [vmem:[%s0 + $0x10] sm:$0xf]
  %v48 = vld [vmem:[%s0 + $0x14] sm:$0xf]
  %v49 = vld [vmem:[%s0 + $0x18] sm:$0xf]
  %v50 = vld [vmem:[%s0 + $0x1c] sm:$0xf]
  %v51 = vld [vmem:[%s0 + $0x20] sm:$0xf]
  %v53 = vperm.slane %v42, 0
  %v64 = vunpack.c.l.b16 %v43
  %v65 = vunpack.c.l.b16 %v44
  %v66 = vunpack.c.l.b16 %v45
  %v67 = vunpack.c.l.b16 %v46
  %v68 = vunpack.c.l.b16 %v47
  %v69 = vunpack.c.l.b16 %v48
  %v70 = vunpack.c.l.b16 %v49
  %v71 = vunpack.c.l.b16 %v50
  %v72 = vunpack.c.l.b16 %v51
  %v73 = vpack.c.b16 %v65, %v64
  %v74 = vpack.c.b16 %v67, %v66
  %v75 = vpack.c.b16 %v69, %v68
  %v76 = vpack.c.b16 %v71, %v70
  %v77 = vpack.c.b16 %v72, %v72
  %v99 = vunpack.c.l.b16 %v26
  %v100 = vunpack.c.l.b16 %v27
  %v101 = vunpack.c.l.b16 %v28
  %v102 = vunpack.c.l.b16 %v29
  %v103 = vunpack.c.l.b16 %v30
  %v104 = vunpack.c.l.b16 %v31
  %v105 = vunpack.c.l.b16 %v32
  %v106 = vunpack.c.l.b16 %v33
  %v107 = vunpack.c.l.b16 %v34
  %v108 = vunpack.c.l.b16 %v35
  %v109 = vunpack.c.l.b16 %v36
  %v110 = vunpack.c.l.b16 %v37
  %v111 = vunpack.c.l.b16 %v38
  %v112 = vunpack.c.l.b16 %v39
  %v113 = vunpack.c.l.b16 %v40
  %v114 = vunpack.c.l.b16 %v41
  %v115 = vpack.c.b16 %v100, %v99
  %v116 = vpack.c.b16 %v102, %v101
  %v117 = vpack.c.b16 %v104, %v103
  %v118 = vpack.c.b16 %v106, %v105
  %v119 = vpack.c.b16 %v108, %v107
  %v120 = vpack.c.b16 %v110, %v109
  %v121 = vpack.c.b16 %v112, %v111
  %v122 = vpack.c.b16 %v114, %v113
  %131 = vmatpush.bf16.msra.mxu0 %v122
  %132 = vmatpush.bf16.msra.mxu0 %v121
  %133 = vmatpush.bf16.msra.mxu0 %v120
  %134 = vmatpush.bf16.msra.mxu0 %v119
  %135 = vmatpush.bf16.msra.mxu0 %v118
  %136 = vmatpush.bf16.msra.mxu0 %v117
  %137 = vmatpush.bf16.msra.mxu0 %v116
  %138 = vmatpush.bf16.msra.mxu0 %v115
  %139 = vmatmul.bf16.gmra.mxu0 %v73
  %v140 = vpop.f32.mrf.mxu0
  %v141 = vadd.f32 %v53, %v140
  %v142 = vpop.f32.mrf.mxu0
  %v143 = vadd.f32 %v53, %v142
  %144 = vmatmul.bf16.gmra.mxu0 %v74
  %v145 = vpop.f32.mrf.mxu0
  %v146 = vadd.f32 %v53, %v145
  %v147 = vpop.f32.mrf.mxu0
  %v148 = vadd.f32 %v53, %v147
  %149 = vmatmul.bf16.gmra.mxu0 %v75
  %v150 = vpop.f32.mrf.mxu0
  %v151 = vadd.f32 %v53, %v150
  %v152 = vpop.f32.mrf.mxu0
  %v153 = vadd.f32 %v53, %v152
  %154 = vmatmul.bf16.gmra.mxu0 %v76
  %v155 = vpop.f32.mrf.mxu0
  %v156 = vadd.f32 %v53, %v155
  %v157 = vpop.f32.mrf.mxu0
  %v158 = vadd.f32 %v53, %v157
  %159 = vmatmul.bf16.gmra.mxu0 %v77
  %v160 = vpop.f32.mrf.mxu0
  %v161 = vadd.f32 %v53, %v160
  %v162 = vpop.f32.mrf.mxu0
  %163 = vdwg.mxu0
  %v164 = vmax.f32 %v141, 0.0
  %v165 = vmax.f32 %v143, 0.0
  %v166 = vmax.f32 %v146, 0.0
  %v167 = vmax.f32 %v148, 0.0
  %v168 = vmax.f32 %v151, 0.0
  %v169 = vmax.f32 %v153, 0.0
  %v170 = vmax.f32 %v156, 0.0
  %v171 = vmax.f32 %v158, 0.0
  %v172 = vmax.f32 %v161, 0.0
  %v173 = vld [vmem:[%s0 + $0x24] sm:$0xf]
  %v174 = vld [vmem:[%s0 + $0x28] sm:$0xf]
  %v175 = vld [vmem:[%s0 + $0x2c] sm:$0xf]
  %v176 = vld [vmem:[%s0 + $0x30] sm:$0xf]
  %v177 = vld [vmem:[%s0 + $0x34] sm:$0xf]
  %v178 = vld [vmem:[%s0 + $0x38] sm:$0xf]
  %v179 = vld [vmem:[%s0 + $0x3c] sm:$0xf]
  %v180 = vld [vmem:[%s0 + $0x40] sm:$0xf]
  %v181 = vld [vmem:[%s0 + $0x44] sm:$0xf]
  %v191 = vunpack.c.l.b16 %v173
  %v192 = vunpack.c.l.b16 %v174
  %v193 = vunpack.c.l.b16 %v175
  %v194 = vunpack.c.l.b16 %v176
  %v195 = vunpack.c.l.b16 %v177
  %v196 = vunpack.c.l.b16 %v178
  %v197 = vunpack.c.l.b16 %v179
  %v198 = vunpack.c.l.b16 %v180
  %v199 = vunpack.c.l.b16 %v181
  %v200 = vpack.c.b16 %v192, %v191
  %v201 = vpack.c.b16 %v194, %v193
  %v202 = vpack.c.b16 %v196, %v195
  %v203 = vpack.c.b16 %v198, %v197
  %v204 = vpack.c.b16 %v199, %v199
  %210 = vmatpush.bf16.msra.mxu0 %v122
  %211 = vmatpush.bf16.msra.mxu0 %v121
  %212 = vmatpush.bf16.msra.mxu0 %v120
  %213 = vmatpush.bf16.msra.mxu0 %v119
  %214 = vmatpush.bf16.msra.mxu0 %v118
  %215 = vmatpush.bf16.msra.mxu0 %v117
  %216 = vmatpush.bf16.msra.mxu0 %v116
  %217 = vmatpush.bf16.msra.mxu0 %v115
  %218 = vmatmul.bf16.gmra.mxu0 %v200
  %v219 = vpop.f32.mrf.mxu0
  %v220 = vadd.f32 %v53, %v219
  %v221 = vpop.f32.mrf.mxu0
  %v222 = vadd.f32 %v53, %v221
  %223 = vmatmul.bf16.gmra.mxu0 %v201
  %v224 = vpop.f32.mrf.mxu0
  %v225 = vadd.f32 %v53, %v224
  %v226 = vpop.f32.mrf.mxu0
  %v227 = vadd.f32 %v53, %v226
  %228 = vmatmul.bf16.gmra.mxu0 %v202
  %v229 = vpop.f32.mrf.mxu0
  %v230 = vadd.f32 %v53, %v229
  %v231 = vpop.f32.mrf.mxu0
  %v232 = vadd.f32 %v53, %v231
  %233 = vmatmul.bf16.gmra.mxu0 %v203
  %v234 = vpop.f32.mrf.mxu0
  %v235 = vadd.f32 %v53, %v234
  %v236 = vpop.f32.mrf.mxu0
  %v237 = vadd.f32 %v53, %v236
  %238 = vmatmul.bf16.gmra.mxu0 %v204
  %v239 = vpop.f32.mrf.mxu0
  %v240 = vadd.f32 %v53, %v239
  %v241 = vpop.f32.mrf.mxu0
  %242 = vdwg.mxu0
  %v243 = vmax.f32 %v220, 0.0
  %v244 = vmax.f32 %v222, 0.0
  %v245 = vmax.f32 %v225, 0.0
  %v246 = vmax.f32 %v227, 0.0
  %v247 = vmax.f32 %v230, 0.0
  %v248 = vmax.f32 %v232, 0.0
  %v249 = vmax.f32 %v235, 0.0
  %v250 = vmax.f32 %v237, 0.0
  %v251 = vmax.f32 %v240, 0.0
  %v252 = vmax.f32 %v164, %v243
  %v253 = vmax.f32 %v165, %v244
  %v254 = vmax.f32 %v166, %v245
  %v255 = vmax.f32 %v167, %v246
  %v256 = vmax.f32 %v168, %v247
  %v257 = vmax.f32 %v169, %v248
  %v258 = vmax.f32 %v170, %v249
  %v259 = vmax.f32 %v171, %v250
  %v260 = vmax.f32 %v172, %v251
  %v261 = vld [vmem:[%s0 + $0x48] sm:$0xf]
  %v262 = vld [vmem:[%s0 + $0x4c] sm:$0xf]
  %v263 = vld [vmem:[%s0 + $0x50] sm:$0xf]
  %v264 = vld [vmem:[%s0 + $0x54] sm:$0xf]
  %v265 = vld [vmem:[%s0 + $0x58] sm:$0xf]
  %v266 = vld [vmem:[%s0 + $0x5c] sm:$0xf]
  %v267 = vld [vmem:[%s0 + $0x60] sm:$0xf]
  %v268 = vld [vmem:[%s0 + $0x64] sm:$0xf]
  %v269 = vld [vmem:[%s0 + $0x68] sm:$0xf]
  %v279 = vunpack.c.l.b16 %v261
  %v280 = vunpack.c.l.b16 %v262
  %v281 = vunpack.c.l.b16 %v263
  %v282 = vunpack.c.l.b16 %v264
  %v283 = vunpack.c.l.b16 %v265
  %v284 = vunpack.c.l.b16 %v266
  %v285 = vunpack.c.l.b16 %v267
  %v286 = vunpack.c.l.b16 %v268
  %v287 = vunpack.c.l.b16 %v269
  %v288 = vpack.c.b16 %v280, %v279
  %v289 = vpack.c.b16 %v282, %v281
  %v290 = vpack.c.b16 %v284, %v283
  %v291 = vpack.c.b16 %v286, %v285
  %v292 = vpack.c.b16 %v287, %v287
  %298 = vmatpush.bf16.msra.mxu0 %v122
  %299 = vmatpush.bf16.msra.mxu0 %v121
  %300 = vmatpush.bf16.msra.mxu0 %v120
  %301 = vmatpush.bf16.msra.mxu0 %v119
  %302 = vmatpush.bf16.msra.mxu0 %v118
  %303 = vmatpush.bf16.msra.mxu0 %v117
  %304 = vmatpush.bf16.msra.mxu0 %v116
  %305 = vmatpush.bf16.msra.mxu0 %v115
  %306 = vmatmul.bf16.gmra.mxu0 %v288
  %v307 = vpop.f32.mrf.mxu0
  %v308 = vadd.f32 %v53, %v307
  %v309 = vpop.f32.mrf.mxu0
  %v310 = vadd.f32 %v53, %v309
  %311 = vmatmul.bf16.gmra.mxu0 %v289
  %v312 = vpop.f32.mrf.mxu0
  %v313 = vadd.f32 %v53, %v312
  %v314 = vpop.f32.mrf.mxu0
  %v315 = vadd.f32 %v53, %v314
  %316 = vmatmul.bf16.gmra.mxu0 %v290
  %v317 = vpop.f32.mrf.mxu0
  %v318 = vadd.f32 %v53, %v317
  %v319 = vpop.f32.mrf.mxu0
  %v320 = vadd.f32 %v53, %v319
  %321 = vmatmul.bf16.gmra.mxu0 %v291
  %v322 = vpop.f32.mrf.mxu0
  %v323 = vadd.f32 %v53, %v322
  %v324 = vpop.f32.mrf.mxu0
  %v325 = vadd.f32 %v53, %v324
  %326 = vmatmul.bf16.gmra.mxu0 %v292
  %v327 = vpop.f32.mrf.mxu0
  %v328 = vadd.f32 %v53, %v327
  %v329 = vpop.f32.mrf.mxu0
  %330 = vdwg.mxu0
  %v331 = vmax.f32 %v308, 0.0
  %v332 = vmax.f32 %v310, 0.0
  %v333 = vmax.f32 %v313, 0.0
  %v334 = vmax.f32 %v315, 0.0
  %v335 = vmax.f32 %v318, 0.0
  %v336 = vmax.f32 %v320, 0.0
  %v337 = vmax.f32 %v323, 0.0
  %v338 = vmax.f32 %v325, 0.0
  %v339 = vmax.f32 %v328, 0.0
  %v340 = vmax.f32 %v252, %v331
  %v341 = vmax.f32 %v253, %v332
  %v342 = vmax.f32 %v254, %v333
  %v343 = vmax.f32 %v255, %v334
  %v344 = vmax.f32 %v256, %v335
  %v345 = vmax.f32 %v257, %v336
  %v346 = vmax.f32 %v258, %v337
  %v347 = vmax.f32 %v259, %v338
  %v348 = vmax.f32 %v260, %v339
  %v349 = vld [vmem:[%s0 + $0x6c] sm:$0xf]
  %v350 = vld [vmem:[%s0 + $0x70] sm:$0xf]
  %v351 = vld [vmem:[%s0 + $0x74] sm:$0xf]
  %v352 = vld [vmem:[%s0 + $0x78] sm:$0xf]
  %v353 = vld [vmem:[%s0 + $0x7c] sm:$0xf]
  %v354 = vld [vmem:[%s0 + $0x80] sm:$0xf]
  %v355 = vld [vmem:[%s0 + $0x84] sm:$0xf]
  %v356 = vld [vmem:[%s0 + $0x88] sm:$0xf]
  %v357 = vld [vmem:[%s0 + $0x8c] sm:$0xf]
  %v367 = vunpack.c.l.b16 %v349
  %v368 = vunpack.c.l.b16 %v350
  %v369 = vunpack.c.l.b16 %v351
  %v370 = vunpack.c.l.b16 %v352
  %v371 = vunpack.c.l.b16 %v353
  %v372 = vunpack.c.l.b16 %v354
  %v373 = vunpack.c.l.b16 %v355
  %v374 = vunpack.c.l.b16 %v356
  %v375 = vunpack.c.l.b16 %v357
  %v376 = vpack.c.b16 %v368, %v367
  %v377 = vpack.c.b16 %v370, %v369
  %v378 = vpack.c.b16 %v372, %v371
  %v379 = vpack.c.b16 %v374, %v373
  %v380 = vpack.c.b16 %v375, %v375
  %386 = vmatpush.bf16.msra.mxu0 %v122
  %387 = vmatpush.bf16.msra.mxu0 %v121
  %388 = vmatpush.bf16.msra.mxu0 %v120
  %389 = vmatpush.bf16.msra.mxu0 %v119
  %390 = vmatpush.bf16.msra.mxu0 %v118
  %391 = vmatpush.bf16.msra.mxu0 %v117
  %392 = vmatpush.bf16.msra.mxu0 %v116
  %393 = vmatpush.bf16.msra.mxu0 %v115
  %394 = vmatmul.bf16.gmra.mxu0 %v376
  %v395 = vpop.f32.mrf.mxu0
  %v396 = vadd.f32 %v53, %v395
  %v397 = vpop.f32.mrf.mxu0
  %v398 = vadd.f32 %v53, %v397
  %399 = vmatmul.bf16.gmra.mxu0 %v377
  %v400 = vpop.f32.mrf.mxu0
  %v401 = vadd.f32 %v53, %v400
  %v402 = vpop.f32.mrf.mxu0
  %v403 = vadd.f32 %v53, %v402
  %404 = vmatmul.bf16.gmra.mxu0 %v378
  %v405 = vpop.f32.mrf.mxu0
  %v406 = vadd.f32 %v53, %v405
  %v407 = vpop.f32.mrf.mxu0
  %v408 = vadd.f32 %v53, %v407
  %409 = vmatmul.bf16.gmra.mxu0 %v379
  %v410 = vpop.f32.mrf.mxu0
  %v411 = vadd.f32 %v53, %v410
  %v412 = vpop.f32.mrf.mxu0
  %v413 = vadd.f32 %v53, %v412
  %414 = vmatmul.bf16.gmra.mxu0 %v380
  %v415 = vpop.f32.mrf.mxu0
  %v416 = vadd.f32 %v53, %v415
  %v417 = vpop.f32.mrf.mxu0
  %418 = vdwg.mxu0
  %v419 = vmax.f32 %v396, 0.0
  %v420 = vmax.f32 %v398, 0.0
  %v421 = vmax.f32 %v401, 0.0
  %v422 = vmax.f32 %v403, 0.0
  %v423 = vmax.f32 %v406, 0.0
  %v424 = vmax.f32 %v408, 0.0
  %v425 = vmax.f32 %v411, 0.0
  %v426 = vmax.f32 %v413, 0.0
  %v427 = vmax.f32 %v416, 0.0
  %v428 = vmax.f32 %v340, %v419
  %v429 = vmax.f32 %v341, %v420
  %v430 = vmax.f32 %v342, %v421
  %v431 = vmax.f32 %v343, %v422
  %v432 = vmax.f32 %v344, %v423
  %v433 = vmax.f32 %v345, %v424
  %v434 = vmax.f32 %v346, %v425
  %v435 = vmax.f32 %v347, %v426
  %v436 = vmax.f32 %v348, %v427
  %437 = vst [vmem:[#allocation2] sm:$0xff] %v428
  %438 = vst [vmem:[#allocation2 + $0x8] sm:$0xff] %v429
  %439 = vst [vmem:[#allocation2 + $0x10] sm:$0xff] %v430
  %440 = vst [vmem:[#allocation2 + $0x18] sm:$0xff] %v431
  %441 = vst [vmem:[#allocation2 + $0x20] sm:$0xff] %v432
  %442 = vst [vmem:[#allocation2 + $0x28] sm:$0xff] %v433
  %443 = vst [vmem:[#allocation2 + $0x30] sm:$0xff] %v434
  %444 = vst [vmem:[#allocation2 + $0x38] sm:$0xff] %v435
  %445 = vst [vmem:[#allocation2 + $0x40] sm:$0xff] %v436
  %446 = vst [vmem:[#allocation2 + $0x48] sm:$0xff] 0.0
  %447 = vst [vmem:[#allocation2 + $0x50] sm:$0xff] 0.0
  %448 = vst [vmem:[#allocation3] sm:$0xff] 0.0
  %449 = vst [vmem:[#allocation3 + $0x8] sm:$0xff] 0.0
  %450 = vst [vmem:[#allocation3 + $0x10] sm:$0xff] 0.0
  %451 = vst [vmem:[#allocation3 + $0x18] sm:$0xff] 0.0
  %452 = vst [vmem:[#allocation3 + $0x20] sm:$0xff] 0.0
  %453 = vst [vmem:[#allocation3 + $0x28] sm:$0xff] 0.0
  %454 = vst [vmem:[#allocation3 + $0x30] sm:$0xff] 0.0
  %455 = vst [vmem:[#allocation3 + $0x38] sm:$0xff] 0.0
  %456 = vst [vmem:[#allocation3 + $0x40] sm:$0xff] 0.0
  %457 = vst [vmem:[#allocation3 + $0x48] sm:$0xff] 0.0
  %458 = vst [vmem:[#allocation3 + $0x50] sm:$0xff] 0.0
  %459 = vst [vmem:[#allocation3 + $0x58] sm:$0xff] 0.0
  %460 = vst [vmem:[#allocation3 + $0x60] sm:$0xff] 0.0
  %461 = vst [vmem:[#allocation3 + $0x68] sm:$0xff] 0.0
  %462 = vst [vmem:[#allocation3 + $0x70] sm:$0xff] 0.0
  %463 = vst [vmem:[#allocation3 + $0x78] sm:$0xff] 0.0
  %464 = vst [vmem:[#allocation3 + $0x80] sm:$0xff] 0.0
  %465 = vst [vmem:[#allocation3 + $0x88] sm:$0xff] 0.0
  %v466 = vld [vmem:[#allocation2] sm:$0xff]
  %v467 = vld [vmem:[#allocation2 + $0x8] sm:$0xff]
  %v468 = vld [vmem:[#allocation2 + $0x10] sm:$0xff]
  %v469 = vld [vmem:[#allocation2 + $0x18] sm:$0xff]
  %v470 = vld [vmem:[#allocation2 + $0x20] sm:$0xff]
  %v471 = vld [vmem:[#allocation2 + $0x28] sm:$0xff]
  %v472 = vld [vmem:[#allocation2 + $0x30] sm:$0xff]
  %v473 = vld [vmem:[#allocation2 + $0x38] sm:$0xff]
  %v474 = vld [vmem:[#allocation2 + $0x40] sm:$0xff]
  %vm475 = vcmask 130048
  %476 = vst.msk [vmem:[#allocation3] sm:$0xff] %vm475, %v466
  %477 = vst.msk [vmem:[#allocation3 + $0x10] sm:$0xff] %vm475, %v467
  %478 = vst.msk [vmem:[#allocation3 + $0x20] sm:$0xff] %vm475, %v468
  %479 = vst.msk [vmem:[#allocation3 + $0x30] sm:$0xff] %vm475, %v469
  %480 = vst.msk [vmem:[#allocation3 + $0x40] sm:$0xff] %vm475, %v470
  %481 = vst.msk [vmem:[#allocation3 + $0x50] sm:$0xff] %vm475, %v471
  %482 = vst.msk [vmem:[#allocation3 + $0x60] sm:$0xff] %vm475, %v472
  %483 = vst.msk [vmem:[#allocation3 + $0x70] sm:$0xff] %vm475, %v473
  %484 = vst.msk [vmem:[#allocation3 + $0x80] sm:$0xff] %vm475, %v474
  %v485 = vld [vmem:[#allocation2 + $0x1] sm:$0xff]
  %v486 = vld [vmem:[#allocation2 + $0x9] sm:$0xff]
  %v487 = vld [vmem:[#allocation2 + $0x11] sm:$0xff]
  %v488 = vld [vmem:[#allocation2 + $0x19] sm:$0xff]
  %v489 = vld [vmem:[#allocation2 + $0x21] sm:$0xff]
  %v490 = vld [vmem:[#allocation2 + $0x29] sm:$0xff]
  %v491 = vld [vmem:[#allocation2 + $0x31] sm:$0xff]
  %v492 = vld [vmem:[#allocation2 + $0x39] sm:$0xff]
  %v493 = vld [vmem:[#allocation2 + $0x41] sm:$0xff]
  %503 = vrot.lane.b32.xlu0 %v485, 16
  %v504 = vpop.permute.xlu0 %503
  %505 = vrot.lane.b32.xlu0 %v486, 16
  %v506 = vpop.permute.xlu0 %505
  %507 = vrot.lane.b32.xlu0 %v487, 16
  %v508 = vpop.permute.xlu0 %507
  %509 = vrot.lane.b32.xlu0 %v488, 16
  %v510 = vpop.permute.xlu0 %509
  %511 = vrot.lane.b32.xlu0 %v489, 16
  %v512 = vpop.permute.xlu0 %511
  %513 = vrot.lane.b32.xlu0 %v490, 16
  %v514 = vpop.permute.xlu0 %513
  %515 = vrot.lane.b32.xlu0 %v491, 16
  %v516 = vpop.permute.xlu0 %515
  %517 = vrot.lane.b32.xlu0 %v492, 16
  %v518 = vpop.permute.xlu0 %517
  %519 = vrot.lane.b32.xlu0 %v493, 16
  %v520 = vpop.permute.xlu0 %519
  %vm530 = vcmask 261248
  %531 = vst.msk [vmem:[#allocation3] sm:$0xff] %vm530, %v504
  %532 = vst.msk [vmem:[#allocation3 + $0x10] sm:$0xff] %vm530, %v506
  %533 = vst.msk [vmem:[#allocation3 + $0x20] sm:$0xff] %vm530, %v508
  %534 = vst.msk [vmem:[#allocation3 + $0x30] sm:$0xff] %vm530, %v510
  %535 = vst.msk [vmem:[#allocation3 + $0x40] sm:$0xff] %vm530, %v512
  %536 = vst.msk [vmem:[#allocation3 + $0x50] sm:$0xff] %vm530, %v514
  %537 = vst.msk [vmem:[#allocation3 + $0x60] sm:$0xff] %vm530, %v516
  %538 = vst.msk [vmem:[#allocation3 + $0x70] sm:$0xff] %vm530, %v518
  %539 = vst.msk [vmem:[#allocation3 + $0x80] sm:$0xff] %vm530, %v520
  %v540 = vld [vmem:[#allocation2 + $0x2] sm:$0xff]
  %v541 = vld [vmem:[#allocation2 + $0xa] sm:$0xff]
  %v542 = vld [vmem:[#allocation2 + $0x12] sm:$0xff]
  %v543 = vld [vmem:[#allocation2 + $0x1a] sm:$0xff]
  %v544 = vld [vmem:[#allocation2 + $0x22] sm:$0xff]
  %v545 = vld [vmem:[#allocation2 + $0x2a] sm:$0xff]
  %v546 = vld [vmem:[#allocation2 + $0x32] sm:$0xff]
  %v547 = vld [vmem:[#allocation2 + $0x3a] sm:$0xff]
  %v548 = vld [vmem:[#allocation2 + $0x42] sm:$0xff]
  %558 = vrot.lane.b32.xlu0 %v540, 32
  %v559 = vpop.permute.xlu0 %558
  %560 = vrot.lane.b32.xlu0 %v541, 32
  %v561 = vpop.permute.xlu0 %560
  %562 = vrot.lane.b32.xlu0 %v542, 32
  %v563 = vpop.permute.xlu0 %562
  %564 = vrot.lane.b32.xlu0 %v543, 32
  %v565 = vpop.permute.xlu0 %564
  %566 = vrot.lane.b32.xlu0 %v544, 32
  %v567 = vpop.permute.xlu0 %566
  %568 = vrot.lane.b32.xlu0 %v545, 32
  %v569 = vpop.permute.xlu0 %568
  %570 = vrot.lane.b32.xlu0 %v546, 32
  %v571 = vpop.permute.xlu0 %570
  %572 = vrot.lane.b32.xlu0 %v547, 32
  %v573 = vpop.permute.xlu0 %572
  %574 = vrot.lane.b32.xlu0 %v548, 32
  %v575 = vpop.permute.xlu0 %574
  %vm585 = vcmask 392448
  %586 = vst.msk [vmem:[#allocation3] sm:$0xff] %vm585, %v559
  %587 = vst.msk [vmem:[#allocation3 + $0x10] sm:$0xff] %vm585, %v561
  %588 = vst.msk [vmem:[#allocation3 + $0x20] sm:$0xff] %vm585, %v563
  %589 = vst.msk [vmem:[#allocation3 + $0x30] sm:$0xff] %vm585, %v565
  %590 = vst.msk [vmem:[#allocation3 + $0x40] sm:$0xff] %vm585, %v567
  %591 = vst.msk [vmem:[#allocation3 + $0x50] sm:$0xff] %vm585, %v569
  %592 = vst.msk [vmem:[#allocation3 + $0x60] sm:$0xff] %vm585, %v571
  %593 = vst.msk [vmem:[#allocation3 + $0x70] sm:$0xff] %vm585, %v573
  %594 = vst.msk [vmem:[#allocation3 + $0x80] sm:$0xff] %vm585, %v575
  %v595 = vld [vmem:[#allocation2 + $0x6] sm:$0xff]
  %v596 = vld [vmem:[#allocation2 + $0xe] sm:$0xff]
  %v597 = vld [vmem:[#allocation2 + $0x16] sm:$0xff]
  %v598 = vld [vmem:[#allocation2 + $0x1e] sm:$0xff]
  %v599 = vld [vmem:[#allocation2 + $0x26] sm:$0xff]
  %v600 = vld [vmem:[#allocation2 + $0x2e] sm:$0xff]
  %v601 = vld [vmem:[#allocation2 + $0x36] sm:$0xff]
  %v602 = vld [vmem:[#allocation2 + $0x3e] sm:$0xff]
  %v603 = vld [vmem:[#allocation2 + $0x46] sm:$0xff]
  %613 = vrot.lane.b32.xlu0 %v595, 48
  %v614 = vpop.permute.xlu0 %613
  %615 = vrot.lane.b32.xlu0 %v596, 48
  %v616 = vpop.permute.xlu0 %615
  %617 = vrot.lane.b32.xlu0 %v597, 48
  %v618 = vpop.permute.xlu0 %617
  %619 = vrot.lane.b32.xlu0 %v598, 48
  %v620 = vpop.permute.xlu0 %619
  %621 = vrot.lane.b32.xlu0 %v599, 48
  %v622 = vpop.permute.xlu0 %621
  %623 = vrot.lane.b32.xlu0 %v600, 48
  %v624 = vpop.permute.xlu0 %623
  %625 = vrot.lane.b32.xlu0 %v601, 48
  %v626 = vpop.permute.xlu0 %625
  %627 = vrot.lane.b32.xlu0 %v602, 48
  %v628 = vpop.permute.xlu0 %627
  %629 = vrot.lane.b32.xlu0 %v603, 48
  %v630 = vpop.permute.xlu0 %629
  %vm640 = vcmask 523648
  %641 = vst.msk [vmem:[#allocation3] sm:$0xff] %vm640, %v614
  %642 = vst.msk [vmem:[#allocation3 + $0x10] sm:$0xff] %vm640, %v616
  %643 = vst.msk [vmem:[#allocation3 + $0x20] sm:$0xff] %vm640, %v618
  %644 = vst.msk [vmem:[#allocation3 + $0x30] sm:$0xff] %vm640, %v620
  %645 = vst.msk [vmem:[#allocation3 + $0x40] sm:$0xff] %vm640, %v622
  %646 = vst.msk [vmem:[#allocation3 + $0x50] sm:$0xff] %vm640, %v624
  %647 = vst.msk [vmem:[#allocation3 + $0x60] sm:$0xff] %vm640, %v626
  %648 = vst.msk [vmem:[#allocation3 + $0x70] sm:$0xff] %vm640, %v628
  %649 = vst.msk [vmem:[#allocation3 + $0x80] sm:$0xff] %vm640, %v630
  %v650 = vld [vmem:[#allocation2 + $0x7] sm:$0xff]
  %v651 = vld [vmem:[#allocation2 + $0xf] sm:$0xff]
  %v652 = vld [vmem:[#allocation2 + $0x17] sm:$0xff]
  %v653 = vld [vmem:[#allocation2 + $0x1f] sm:$0xff]
  %v654 = vld [vmem:[#allocation2 + $0x27] sm:$0xff]
  %v655 = vld [vmem:[#allocation2 + $0x2f] sm:$0xff]
  %v656 = vld [vmem:[#allocation2 + $0x37] sm:$0xff]
  %v657 = vld [vmem:[#allocation2 + $0x3f] sm:$0xff]
  %v658 = vld [vmem:[#allocation2 + $0x47] sm:$0xff]
  %668 = vrot.lane.b32.xlu0 %v650, 64
  %v669 = vpop.permute.xlu0 %668
  %670 = vrot.lane.b32.xlu0 %v651, 64
  %v671 = vpop.permute.xlu0 %670
  %672 = vrot.lane.b32.xlu0 %v652, 64
  %v673 = vpop.permute.xlu0 %672
  %674 = vrot.lane.b32.xlu0 %v653, 64
  %v675 = vpop.permute.xlu0 %674
  %676 = vrot.lane.b32.xlu0 %v654, 64
  %v677 = vpop.permute.xlu0 %676
  %678 = vrot.lane.b32.xlu0 %v655, 64
  %v679 = vpop.permute.xlu0 %678
  %680 = vrot.lane.b32.xlu0 %v656, 64
  %v681 = vpop.permute.xlu0 %680
  %682 = vrot.lane.b32.xlu0 %v657, 64
  %v683 = vpop.permute.xlu0 %682
  %684 = vrot.lane.b32.xlu0 %v658, 64
  %v685 = vpop.permute.xlu0 %684
  %vm695 = vcmask 654848
  %696 = vst.msk [vmem:[#allocation3] sm:$0xff] %vm695, %v669
  %697 = vst.msk [vmem:[#allocation3 + $0x10] sm:$0xff] %vm695, %v671
  %698 = vst.msk [vmem:[#allocation3 + $0x20] sm:$0xff] %vm695, %v673
  %699 = vst.msk [vmem:[#allocation3 + $0x30] sm:$0xff] %vm695, %v675
  %700 = vst.msk [vmem:[#allocation3 + $0x40] sm:$0xff] %vm695, %v677
  %701 = vst.msk [vmem:[#allocation3 + $0x50] sm:$0xff] %vm695, %v679
  %702 = vst.msk [vmem:[#allocation3 + $0x60] sm:$0xff] %vm695, %v681
  %703 = vst.msk [vmem:[#allocation3 + $0x70] sm:$0xff] %vm695, %v683
  %704 = vst.msk [vmem:[#allocation3 + $0x80] sm:$0xff] %vm695, %v685
  %v705 = vld [vmem:[#allocation2 + $0x8] sm:$0xff]
  %v706 = vld [vmem:[#allocation2 + $0x10] sm:$0xff]
  %v707 = vld [vmem:[#allocation2 + $0x18] sm:$0xff]
  %v708 = vld [vmem:[#allocation2 + $0x20] sm:$0xff]
  %v709 = vld [vmem:[#allocation2 + $0x28] sm:$0xff]
  %v710 = vld [vmem:[#allocation2 + $0x30] sm:$0xff]
  %v711 = vld [vmem:[#allocation2 + $0x38] sm:$0xff]
  %v712 = vld [vmem:[#allocation2 + $0x40] sm:$0xff]
  %v713 = vld [vmem:[#allocation2 + $0x48] sm:$0xff]
  %723 = vrot.lane.b32.xlu0 %v705, 80
  %v724 = vpop.permute.xlu0 %723
  %725 = vrot.lane.b32.xlu0 %v706, 80
  %v726 = vpop.permute.xlu0 %725
  %727 = vrot.lane.b32.xlu0 %v707, 80
  %v728 = vpop.permute.xlu0 %727
  %729 = vrot.lane.b32.xlu0 %v708, 80
  %v730 = vpop.permute.xlu0 %729
  %731 = vrot.lane.b32.xlu0 %v709, 80
  %v732 = vpop.permute.xlu0 %731
  %733 = vrot.lane.b32.xlu0 %v710, 80
  %v734 = vpop.permute.xlu0 %733
  %735 = vrot.lane.b32.xlu0 %v711, 80
  %v736 = vpop.permute.xlu0 %735
  %737 = vrot.lane.b32.xlu0 %v712, 80
  %v738 = vpop.permute.xlu0 %737
  %739 = vrot.lane.b32.xlu0 %v713, 80
  %v740 = vpop.permute.xlu0 %739
  %vm750 = vcmask 786048
  %751 = vst.msk [vmem:[#allocation3] sm:$0xff] %vm750, %v724
  %752 = vst.msk [vmem:[#allocation3 + $0x10] sm:$0xff] %vm750, %v726
  %753 = vst.msk [vmem:[#allocation3 + $0x20] sm:$0xff] %vm750, %v728
  %754 = vst.msk [vmem:[#allocation3 + $0x30] sm:$0xff] %vm750, %v730
  %755 = vst.msk [vmem:[#allocation3 + $0x40] sm:$0xff] %vm750, %v732
  %756 = vst.msk [vmem:[#allocation3 + $0x50] sm:$0xff] %vm750, %v734
  %757 = vst.msk [vmem:[#allocation3 + $0x60] sm:$0xff] %vm750, %v736
  %758 = vst.msk [vmem:[#allocation3 + $0x70] sm:$0xff] %vm750, %v738
  %759 = vst.msk [vmem:[#allocation3 + $0x80] sm:$0xff] %vm750, %v740
  %v760 = vld [vmem:[#allocation2 + $0xc] sm:$0xff]
  %v761 = vld [vmem:[#allocation2 + $0x14] sm:$0xff]
  %v762 = vld [vmem:[#allocation2 + $0x1c] sm:$0xff]
  %v763 = vld [vmem:[#allocation2 + $0x24] sm:$0xff]
  %v764 = vld [vmem:[#allocation2 + $0x2c] sm:$0xff]
  %v765 = vld [vmem:[#allocation2 + $0x34] sm:$0xff]
  %v766 = vld [vmem:[#allocation2 + $0x3c] sm:$0xff]
  %v767 = vld [vmem:[#allocation2 + $0x44] sm:$0xff]
  %v768 = vld [vmem:[#allocation2 + $0x4c] sm:$0xff]
  %778 = vrot.lane.b32.xlu0 %v760, 96
  %v779 = vpop.permute.xlu0 %778
  %780 = vrot.lane.b32.xlu0 %v761, 96
  %v781 = vpop.permute.xlu0 %780
  %782 = vrot.lane.b32.xlu0 %v762, 96
  %v783 = vpop.permute.xlu0 %782
  %784 = vrot.lane.b32.xlu0 %v763, 96
  %v785 = vpop.permute.xlu0 %784
  %786 = vrot.lane.b32.xlu0 %v764, 96
  %v787 = vpop.permute.xlu0 %786
  %788 = vrot.lane.b32.xlu0 %v765, 96
  %v789 = vpop.permute.xlu0 %788
  %790 = vrot.lane.b32.xlu0 %v766, 96
  %v791 = vpop.permute.xlu0 %790
  %792 = vrot.lane.b32.xlu0 %v767, 96
  %v793 = vpop.permute.xlu0 %792
  %794 = vrot.lane.b32.xlu0 %v768, 96
  %v795 = vpop.permute.xlu0 %794
  %vm805 = vcmask 917248
  %806 = vst.msk [vmem:[#allocation3] sm:$0xff] %vm805, %v779
  %807 = vst.msk [vmem:[#allocation3 + $0x10] sm:$0xff] %vm805, %v781
  %808 = vst.msk [vmem:[#allocation3 + $0x20] sm:$0xff] %vm805, %v783
  %809 = vst.msk [vmem:[#allocation3 + $0x30] sm:$0xff] %vm805, %v785
  %810 = vst.msk [vmem:[#allocation3 + $0x40] sm:$0xff] %vm805, %v787
  %811 = vst.msk [vmem:[#allocation3 + $0x50] sm:$0xff] %vm805, %v789
  %812 = vst.msk [vmem:[#allocation3 + $0x60] sm:$0xff] %vm805, %v791
  %813 = vst.msk [vmem:[#allocation3 + $0x70] sm:$0xff] %vm805, %v793
  %814 = vst.msk [vmem:[#allocation3 + $0x80] sm:$0xff] %vm805, %v795
  %v815 = vld [vmem:[#allocation2 + $0xd] sm:$0xff]
  %v816 = vld [vmem:[#allocation2 + $0x15] sm:$0xff]
  %v817 = vld [vmem:[#allocation2 + $0x1d] sm:$0xff]
  %v818 = vld [vmem:[#allocation2 + $0x25] sm:$0xff]
  %v819 = vld [vmem:[#allocation2 + $0x2d] sm:$0xff]
  %v820 = vld [vmem:[#allocation2 + $0x35] sm:$0xff]
  %v821 = vld [vmem:[#allocation2 + $0x3d] sm:$0xff]
  %v822 = vld [vmem:[#allocation2 + $0x45] sm:$0xff]
  %v823 = vld [vmem:[#allocation2 + $0x4d] sm:$0xff]
  %833 = vrot.lane.b32.xlu0 %v815, 112
  %v834 = vpop.permute.xlu0 %833
  %835 = vrot.lane.b32.xlu0 %v816, 112
  %v836 = vpop.permute.xlu0 %835
  %837 = vrot.lane.b32.xlu0 %v817, 112
  %v838 = vpop.permute.xlu0 %837
  %839 = vrot.lane.b32.xlu0 %v818, 112
  %v840 = vpop.permute.xlu0 %839
  %841 = vrot.lane.b32.xlu0 %v819, 112
  %v842 = vpop.permute.xlu0 %841
  %843 = vrot.lane.b32.xlu0 %v820, 112
  %v844 = vpop.permute.xlu0 %843
  %845 = vrot.lane.b32.xlu0 %v821, 112
  %v846 = vpop.permute.xlu0 %845
  %847 = vrot.lane.b32.xlu0 %v822, 112
  %v848 = vpop.permute.xlu0 %847
  %849 = vrot.lane.b32.xlu0 %v823, 112
  %v850 = vpop.permute.xlu0 %849
  %vm860 = vcmask 1048448
  %861 = vst.msk [vmem:[#allocation3] sm:$0xff] %vm860, %v834
  %862 = vst.msk [vmem:[#allocation3 + $0x10] sm:$0xff] %vm860, %v836
  %863 = vst.msk [vmem:[#allocation3 + $0x20] sm:$0xff] %vm860, %v838
  %864 = vst.msk [vmem:[#allocation3 + $0x30] sm:$0xff] %vm860, %v840
  %865 = vst.msk [vmem:[#allocation3 + $0x40] sm:$0xff] %vm860, %v842
  %866 = vst.msk [vmem:[#allocation3 + $0x50] sm:$0xff] %vm860, %v844
  %867 = vst.msk [vmem:[#allocation3 + $0x60] sm:$0xff] %vm860, %v846
  %868 = vst.msk [vmem:[#allocation3 + $0x70] sm:$0xff] %vm860, %v848
  %869 = vst.msk [vmem:[#allocation3 + $0x80] sm:$0xff] %vm860, %v850
  %v870 = vld [vmem:[#allocation2 + $0xe] sm:$0xff]
  %v871 = vld [vmem:[#allocation2 + $0x16] sm:$0xff]
  %v872 = vld [vmem:[#allocation2 + $0x1e] sm:$0xff]
  %v873 = vld [vmem:[#allocation2 + $0x26] sm:$0xff]
  %v874 = vld [vmem:[#allocation2 + $0x2e] sm:$0xff]
  %v875 = vld [vmem:[#allocation2 + $0x36] sm:$0xff]
  %v876 = vld [vmem:[#allocation2 + $0x3e] sm:$0xff]
  %v877 = vld [vmem:[#allocation2 + $0x46] sm:$0xff]
  %v878 = vld [vmem:[#allocation2 + $0x4e] sm:$0xff]
  %879 = vst.msk [vmem:[#allocation3 + $0x8] sm:$0xff] %vm475, %v870
  %880 = vst.msk [vmem:[#allocation3 + $0x18] sm:$0xff] %vm475, %v871
  %881 = vst.msk [vmem:[#allocation3 + $0x28] sm:$0xff] %vm475, %v872
  %882 = vst.msk [vmem:[#allocation3 + $0x38] sm:$0xff] %vm475, %v873
  %883 = vst.msk [vmem:[#allocation3 + $0x48] sm:$0xff] %vm475, %v874
  %884 = vst.msk [vmem:[#allocation3 + $0x58] sm:$0xff] %vm475, %v875
  %885 = vst.msk [vmem:[#allocation3 + $0x68] sm:$0xff] %vm475, %v876
  %886 = vst.msk [vmem:[#allocation3 + $0x78] sm:$0xff] %vm475, %v877
  %887 = vst.msk [vmem:[#allocation3 + $0x88] sm:$0xff] %vm475, %v878
  %v888 = vld [vmem:[#allocation3] sm:$0xff]
  %v889 = vld [vmem:[#allocation3 + $0x8] sm:$0xff]
  %v890 = vld [vmem:[#allocation3 + $0x10] sm:$0xff]
  %v891 = vld [vmem:[#allocation3 + $0x18] sm:$0xff]
  %v892 = vld [vmem:[#allocation3 + $0x20] sm:$0xff]
  %v893 = vld [vmem:[#allocation3 + $0x28] sm:$0xff]
  %v894 = vld [vmem:[#allocation3 + $0x30] sm:$0xff]
  %v895 = vld [vmem:[#allocation3 + $0x38] sm:$0xff]
  %v896 = vld [vmem:[#allocation3 + $0x40] sm:$0xff]
  %v897 = vld [vmem:[#allocation3 + $0x48] sm:$0xff]
  %v898 = vld [vmem:[#allocation3 + $0x50] sm:$0xff]
  %v899 = vld [vmem:[#allocation3 + $0x58] sm:$0xff]
  %v900 = vld [vmem:[#allocation3 + $0x60] sm:$0xff]
  %v901 = vld [vmem:[#allocation3 + $0x68] sm:$0xff]
  %v902 = vld [vmem:[#allocation3 + $0x70] sm:$0xff]
  %v903 = vld [vmem:[#allocation3 + $0x78] sm:$0xff]
  %v904 = vld [vmem:[#allocation3 + $0x80] sm:$0xff]
  %v905 = vld [vmem:[#allocation3 + $0x88] sm:$0xff]
  %v906 = vpack.c.bf16 %v890, %v888
  %v907 = vpack.c.bf16 %v891, %v889
  %v908 = vpack.c.bf16 %v894, %v892
  %v909 = vpack.c.bf16 %v895, %v893
  %v910 = vpack.c.bf16 %v898, %v896
  %v911 = vpack.c.bf16 %v899, %v897
  %v912 = vpack.c.bf16 %v902, %v900
  %v913 = vpack.c.bf16 %v903, %v901
  %v914 = vpack.c.bf16 %v904, %v904
  %v915 = vpack.c.bf16 %v905, %v905
  %v916 = vld [vmem:[%s3] sm:$0xf]
  %v917 = vld [vmem:[%s3 + $0x4] sm:$0xf]
  %v918 = vld [vmem:[%s3 + $0x8] sm:$0xf]
  %v919 = vld [vmem:[%s3 + $0xc] sm:$0xf]
  %v920 = vld [vmem:[%s3 + $0x10] sm:$0xf]
  %v921 = vld [vmem:[%s3 + $0x14] sm:$0xf]
  %v922 = vld [vmem:[%s3 + $0x18] sm:$0xf]
  %v923 = vld [vmem:[%s3 + $0x1c] sm:$0xf]
  %v924 = vld [vmem:[%s3 + $0x20] sm:$0xf]
  %v925 = vld [vmem:[%s3 + $0x24] sm:$0xf]
  %v926 = vld [vmem:[%s3 + $0x28] sm:$0xf]
  %v927 = vld [vmem:[%s3 + $0x2c] sm:$0xf]
  %v928 = vld [vmem:[%s3 + $0x30] sm:$0xf]
  %v929 = vld [vmem:[%s3 + $0x34] sm:$0xf]
  %v930 = vld [vmem:[%s3 + $0x38] sm:$0xf]
  %v931 = vld [vmem:[%s3 + $0x3c] sm:$0xf]
  %v932 = vld [vmem:[%s3 + $0x40] sm:$0xf]
  %v933 = vld [vmem:[%s3 + $0x44] sm:$0xf]
  %v934 = vld [vmem:[%s3 + $0x48] sm:$0xf]
  %v935 = vld [vmem:[%s3 + $0x4c] sm:$0xf]
  %v936 = vld [vmem:[%s3 + $0x50] sm:$0xf]
  %v937 = vld [vmem:[%s3 + $0x54] sm:$0xf]
  %v938 = vld [vmem:[%s3 + $0x58] sm:$0xf]
  %v939 = vld [vmem:[%s3 + $0x5c] sm:$0xf]
  %v940 = vld [vmem:[%s3 + $0x60] sm:$0xf]
  %v941 = vld [vmem:[%s3 + $0x64] sm:$0xf]
  %v942 = vld [vmem:[%s3 + $0x68] sm:$0xf]
  %v943 = vld [vmem:[%s3 + $0x6c] sm:$0xf]
  %v944 = vld [vmem:[%s3 + $0x70] sm:$0xf]
  %v945 = vld [vmem:[%s3 + $0x74] sm:$0xf]
  %v946 = vld [vmem:[%s3 + $0x78] sm:$0xf]
  %v947 = vld [vmem:[%s3 + $0x7c] sm:$0xf]
  %v948 = vld [vmem:[%s4] sm:$0x1]
  %v950 = vperm.slane %v948, 0
  %v984 = vunpack.c.l.b16 %v916
  %v985 = vunpack.c.l.b16 %v917
  %v986 = vunpack.c.l.b16 %v918
  %v987 = vunpack.c.l.b16 %v919
  %v988 = vunpack.c.l.b16 %v920
  %v989 = vunpack.c.l.b16 %v921
  %v990 = vunpack.c.l.b16 %v922
  %v991 = vunpack.c.l.b16 %v923
  %v992 = vunpack.c.l.b16 %v924
  %v993 = vunpack.c.l.b16 %v925
  %v994 = vunpack.c.l.b16 %v926
  %v995 = vunpack.c.l.b16 %v927
  %v996 = vunpack.c.l.b16 %v928
  %v997 = vunpack.c.l.b16 %v929
  %v998 = vunpack.c.l.b16 %v930
  %v999 = vunpack.c.l.b16 %v931
  %v1000 = vunpack.c.l.b16 %v932
  %v1001 = vunpack.c.l.b16 %v933
  %v1002 = vunpack.c.l.b16 %v934
  %v1003 = vunpack.c.l.b16 %v935
  %v1004 = vunpack.c.l.b16 %v936
  %v1005 = vunpack.c.l.b16 %v937
  %v1006 = vunpack.c.l.b16 %v938
  %v1007 = vunpack.c.l.b16 %v939
  %v1008 = vunpack.c.l.b16 %v940
  %v1009 = vunpack.c.l.b16 %v941
  %v1010 = vunpack.c.l.b16 %v942
  %v1011 = vunpack.c.l.b16 %v943
  %v1012 = vunpack.c.l.b16 %v944
  %v1013 = vunpack.c.l.b16 %v945
  %v1014 = vunpack.c.l.b16 %v946
  %v1015 = vunpack.c.l.b16 %v947
  %v1016 = vpack.c.b16 %v985, %v984
  %v1017 = vpack.c.b16 %v987, %v986
  %v1018 = vpack.c.b16 %v989, %v988
  %v1019 = vpack.c.b16 %v991, %v990
  %v1020 = vpack.c.b16 %v993, %v992
  %v1021 = vpack.c.b16 %v995, %v994
  %v1022 = vpack.c.b16 %v997, %v996
  %v1023 = vpack.c.b16 %v999, %v998
  %v1024 = vpack.c.b16 %v1001, %v1000
  %v1025 = vpack.c.b16 %v1003, %v1002
  %v1026 = vpack.c.b16 %v1005, %v1004
  %v1027 = vpack.c.b16 %v1007, %v1006
  %v1028 = vpack.c.b16 %v1009, %v1008
  %v1029 = vpack.c.b16 %v1011, %v1010
  %v1030 = vpack.c.b16 %v1013, %v1012
  %v1031 = vpack.c.b16 %v1015, %v1014
  %1048 = vmatpush.bf16.msra.mxu0 %v1023
  %1049 = vmatpush.bf16.msra.mxu0 %v1022
  %1050 = vmatpush.bf16.msra.mxu0 %v1021
  %1051 = vmatpush.bf16.msra.mxu0 %v1020
  %1052 = vmatpush.bf16.msra.mxu0 %v1019
  %1053 = vmatpush.bf16.msra.mxu0 %v1018
  %1054 = vmatpush.bf16.msra.mxu0 %v1017
  %1055 = vmatpush.bf16.msra.mxu0 %v1016
  %1056 = vmatmul.bf16.gmra.mxu0 %v906
  %v1057 = vpop.f32.mrf.mxu0
  %v1058 = vadd.f32 %v950, %v1057
  %v1059 = vpop.f32.mrf.mxu0
  %v1060 = vadd.f32 %v950, %v1059
  %1061 = vmatmul.bf16.gmra.mxu0 %v908
  %v1062 = vpop.f32.mrf.mxu0
  %v1063 = vadd.f32 %v950, %v1062
  %v1064 = vpop.f32.mrf.mxu0
  %v1065 = vadd.f32 %v950, %v1064
  %1066 = vmatmul.bf16.gmra.mxu0 %v910
  %v1067 = vpop.f32.mrf.mxu0
  %v1068 = vadd.f32 %v950, %v1067
  %v1069 = vpop.f32.mrf.mxu0
  %v1070 = vadd.f32 %v950, %v1069
  %1071 = vmatmul.bf16.gmra.mxu0 %v912
  %v1072 = vpop.f32.mrf.mxu0
  %v1073 = vadd.f32 %v950, %v1072
  %v1074 = vpop.f32.mrf.mxu0
  %v1075 = vadd.f32 %v950, %v1074
  %1076 = vmatmul.bf16.gmra.mxu0 %v914
  %v1077 = vpop.f32.mrf.mxu0
  %v1078 = vadd.f32 %v950, %v1077
  %v1079 = vpop.f32.mrf.mxu0
  %1080 = vdwg.mxu0
  %1081 = vmatpush.bf16.msra.mxu0 %v1031
  %1082 = vmatpush.bf16.msra.mxu0 %v1030
  %1083 = vmatpush.bf16.msra.mxu0 %v1029
  %1084 = vmatpush.bf16.msra.mxu0 %v1028
  %1085 = vmatpush.bf16.msra.mxu0 %v1027
  %1086 = vmatpush.bf16.msra.mxu0 %v1026
  %1087 = vmatpush.bf16.msra.mxu0 %v1025
  %1088 = vmatpush.bf16.msra.mxu0 %v1024
  %1089 = vmatmul.bf16.gmra.mxu0 %v907
  %v1090 = vpop.f32.mrf.mxu0
  %v1091 = vadd.f32 %v1058, %v1090
  %v1092 = vpop.f32.mrf.mxu0
  %v1093 = vadd.f32 %v1060, %v1092
  %1094 = vmatmul.bf16.gmra.mxu0 %v909
  %v1095 = vpop.f32.mrf.mxu0
  %v1096 = vadd.f32 %v1063, %v1095
  %v1097 = vpop.f32.mrf.mxu0
  %v1098 = vadd.f32 %v1065, %v1097
  %1099 = vmatmul.bf16.gmra.mxu0 %v911
  %v1100 = vpop.f32.mrf.mxu0
  %v1101 = vadd.f32 %v1068, %v1100
  %v1102 = vpop.f32.mrf.mxu0
  %v1103 = vadd.f32 %v1070, %v1102
  %1104 = vmatmul.bf16.gmra.mxu0 %v913
  %v1105 = vpop.f32.mrf.mxu0
  %v1106 = vadd.f32 %v1073, %v1105
  %v1107 = vpop.f32.mrf.mxu0
  %v1108 = vadd.f32 %v1075, %v1107
  %1109 = vmatmul.bf16.gmra.mxu0 %v915
  %v1110 = vpop.f32.mrf.mxu0
  %v1111 = vadd.f32 %v1078, %v1110
  %v1112 = vpop.f32.mrf.mxu0
  %1113 = vdwg.mxu0
  %v1114 = vmax.f32 %v1091, 0.0
  %v1115 = vmax.f32 %v1093, 0.0
  %v1116 = vmax.f32 %v1096, 0.0
  %v1117 = vmax.f32 %v1098, 0.0
  %v1118 = vmax.f32 %v1101, 0.0
  %v1119 = vmax.f32 %v1103, 0.0
  %v1120 = vmax.f32 %v1106, 0.0
  %v1121 = vmax.f32 %v1108, 0.0
  %v1122 = vmax.f32 %v1111, 0.0
  %1123 = vst [vmem:[#allocation4] sm:$0xff] %v1114
  %1124 = vst [vmem:[#allocation4 + $0x8] sm:$0xff] %v1115
  %1125 = vst [vmem:[#allocation4 + $0x10] sm:$0xff] %v1116
  %1126 = vst [vmem:[#allocation4 + $0x18] sm:$0xff] %v1117
  %1127 = vst [vmem:[#allocation4 + $0x20] sm:$0xff] %v1118
  %1128 = vst [vmem:[#allocation4 + $0x28] sm:$0xff] %v1119
  %1129 = vst [vmem:[#allocation4 + $0x30] sm:$0xff] %v1120
  %1130 = vst [vmem:[#allocation4 + $0x38] sm:$0xff] %v1121
  %1131 = vst [vmem:[#allocation4 + $0x40] sm:$0xff] %v1122
  %1132 = vst [vmem:[#allocation4 + $0x48] sm:$0xff] 0.0
  %v1133 = vld [vmem:[#allocation4] sm:$0xff]
  %v1134 = vld [vmem:[#allocation4 + $0x8] sm:$0xff]
  %v1135 = vld [vmem:[#allocation4 + $0x10] sm:$0xff]
  %v1136 = vld [vmem:[#allocation4 + $0x18] sm:$0xff]
  %v1137 = vld [vmem:[#allocation4 + $0x20] sm:$0xff]
  %v1138 = vld [vmem:[#allocation4 + $0x28] sm:$0xff]
  %v1139 = vld [vmem:[#allocation4 + $0x30] sm:$0xff]
  %v1140 = vld [vmem:[#allocation4 + $0x38] sm:$0xff]
  %v1141 = vld [vmem:[#allocation4 + $0x40] sm:$0xff]
  %v1142 = vld [vmem:[#allocation4 + $0x1] sm:$0xff]
  %v1143 = vld [vmem:[#allocation4 + $0x9] sm:$0xff]
  %v1144 = vld [vmem:[#allocation4 + $0x11] sm:$0xff]
  %v1145 = vld [vmem:[#allocation4 + $0x19] sm:$0xff]
  %v1146 = vld [vmem:[#allocation4 + $0x21] sm:$0xff]
  %v1147 = vld [vmem:[#allocation4 + $0x29] sm:$0xff]
  %v1148 = vld [vmem:[#allocation4 + $0x31] sm:$0xff]
  %v1149 = vld [vmem:[#allocation4 + $0x39] sm:$0xff]
  %v1150 = vld [vmem:[#allocation4 + $0x41] sm:$0xff]
  %v1151 = vmax.f32 %v1133, %v1142
  %v1152 = vmax.f32 %v1134, %v1143
  %v1153 = vmax.f32 %v1135, %v1144
  %v1154 = vmax.f32 %v1136, %v1145
  %v1155 = vmax.f32 %v1137, %v1146
  %v1156 = vmax.f32 %v1138, %v1147
  %v1157 = vmax.f32 %v1139, %v1148
  %v1158 = vmax.f32 %v1140, %v1149
  %v1159 = vmax.f32 %v1141, %v1150
  %v1160 = vld [vmem:[#allocation4 + $0x6] sm:$0xff]
  %v1161 = vld [vmem:[#allocation4 + $0xe] sm:$0xff]
  %v1162 = vld [vmem:[#allocation4 + $0x16] sm:$0xff]
  %v1163 = vld [vmem:[#allocation4 + $0x1e] sm:$0xff]
  %v1164 = vld [vmem:[#allocation4 + $0x26] sm:$0xff]
  %v1165 = vld [vmem:[#allocation4 + $0x2e] sm:$0xff]
  %v1166 = vld [vmem:[#allocation4 + $0x36] sm:$0xff]
  %v1167 = vld [vmem:[#allocation4 + $0x3e] sm:$0xff]
  %v1168 = vld [vmem:[#allocation4 + $0x46] sm:$0xff]
  %v1169 = vld [vmem:[#allocation4 + $0x7] sm:$0xff]
  %v1170 = vld [vmem:[#allocation4 + $0xf] sm:$0xff]
  %v1171 = vld [vmem:[#allocation4 + $0x17] sm:$0xff]
  %v1172 = vld [vmem:[#allocation4 + $0x1f] sm:$0xff]
  %v1173 = vld [vmem:[#allocation4 + $0x27] sm:$0xff]
  %v1174 = vld [vmem:[#allocation4 + $0x2f] sm:$0xff]
  %v1175 = vld [vmem:[#allocation4 + $0x37] sm:$0xff]
  %v1176 = vld [vmem:[#allocation4 + $0x3f] sm:$0xff]
  %v1177 = vld [vmem:[#allocation4 + $0x47] sm:$0xff]
  %v1178 = vmax.f32 %v1160, %v1169
  %v1179 = vmax.f32 %v1161, %v1170
  %v1180 = vmax.f32 %v1162, %v1171
  %v1181 = vmax.f32 %v1163, %v1172
  %v1182 = vmax.f32 %v1164, %v1173
  %v1183 = vmax.f32 %v1165, %v1174
  %v1184 = vmax.f32 %v1166, %v1175
  %v1185 = vmax.f32 %v1167, %v1176
  %v1186 = vmax.f32 %v1168, %v1177
  %v1187 = vmax.f32 %v1151, %v1178
  %v1188 = vmax.f32 %v1152, %v1179
  %v1189 = vmax.f32 %v1153, %v1180
  %v1190 = vmax.f32 %v1154, %v1181
  %v1191 = vmax.f32 %v1155, %v1182
  %v1192 = vmax.f32 %v1156, %v1183
  %v1193 = vmax.f32 %v1157, %v1184
  %v1194 = vmax.f32 %v1158, %v1185
  %v1195 = vmax.f32 %v1159, %v1186
  %1196 = vst [vmem:[#allocation5] sm:$0xff] %v1187
  %1197 = vst [vmem:[#allocation5 + $0x8] sm:$0xff] %v1188
  %1198 = vst [vmem:[#allocation5 + $0x10] sm:$0xff] %v1189
  %1199 = vst [vmem:[#allocation5 + $0x18] sm:$0xff] %v1190
  %1200 = vst [vmem:[#allocation5 + $0x20] sm:$0xff] %v1191
  %1201 = vst [vmem:[#allocation5 + $0x28] sm:$0xff] %v1192
  %1202 = vst [vmem:[#allocation5 + $0x30] sm:$0xff] %v1193
  %1203 = vst [vmem:[#allocation5 + $0x38] sm:$0xff] %v1194
  %1204 = vst [vmem:[#allocation5 + $0x40] sm:$0xff] %v1195
  %1205 = vst [vmem:[#allocation6] sm:$0xff] 0.0
  %1206 = vst [vmem:[#allocation6 + $0x8] sm:$0xff] 0.0
  %1207 = vst [vmem:[#allocation6 + $0x10] sm:$0xff] 0.0
  %1208 = vst [vmem:[#allocation6 + $0x18] sm:$0xff] 0.0
  %v1209 = vld [vmem:[#allocation5] sm:$0x1]
  %1210 = vst [vmem:[#allocation6] sm:$0x1] %v1209
  %v1211 = vld [vmem:[#allocation5 + $0x2] sm:$0x1]
  %1212 = vst [vmem:[#allocation6 + $0x8] sm:$0x1] %v1211
  %v1213 = vld [vmem:[#allocation5 + $0xc] sm:$0x1]
  %1214 = vst [vmem:[#allocation6 + $0x10] sm:$0x1] %v1213
  %v1215 = vld [vmem:[#allocation5 + $0xe] sm:$0x1]
  %1216 = vst [vmem:[#allocation6 + $0x18] sm:$0x1] %v1215
  %v1217 = vld [vmem:[#allocation5 + $0x24] sm:$0x1]
  %1218 = vst [vmem:[#allocation6 + $0x1] sm:$0x1] %v1217
  %v1219 = vld [vmem:[#allocation5 + $0x26] sm:$0x1]
  %1220 = vst [vmem:[#allocation6 + $0x9] sm:$0x1] %v1219
  %v1221 = vld [vmem:[#allocation5 + $0x30] sm:$0x1]
  %1222 = vst [vmem:[#allocation6 + $0x11] sm:$0x1] %v1221
  %v1223 = vld [vmem:[#allocation5 + $0x32] sm:$0x1]
  %1224 = vst [vmem:[#allocation6 + $0x19] sm:$0x1] %v1223
  %v1225 = vld [vmem:[#allocation6] sm:$0xff]
  %v1226 = vld [vmem:[#allocation6 + $0x8] sm:$0xff]
  %v1227 = vld [vmem:[#allocation6 + $0x10] sm:$0xff]
  %v1228 = vld [vmem:[#allocation6 + $0x18] sm:$0xff]
  %v1229 = vpack.c.bf16 %v1225, %v1225
  %v1230 = vpack.c.bf16 %v1226, %v1226
  %v1231 = vpack.c.bf16 %v1227, %v1227
  %v1232 = vpack.c.bf16 %v1228, %v1228
  %v1233 = vld [vmem:[%s5] sm:$0xf]
  %v1234 = vld [vmem:[%s5 + $0x4] sm:$0xf]
  %v1235 = vld [vmem:[%s5 + $0x8] sm:$0xf]
  %v1236 = vld [vmem:[%s5 + $0xc] sm:$0xf]
  %v1237 = vld [vmem:[%s5 + $0x10] sm:$0xf]
  %v1238 = vld [vmem:[%s5 + $0x14] sm:$0xf]
  %v1239 = vld [vmem:[%s5 + $0x18] sm:$0xf]
  %v1240 = vld [vmem:[%s5 + $0x1c] sm:$0xf]
  %v1241 = vld [vmem:[%s5 + $0x20] sm:$0xf]
  %v1242 = vld [vmem:[%s5 + $0x24] sm:$0xf]
  %v1243 = vld [vmem:[%s5 + $0x28] sm:$0xf]
  %v1244 = vld [vmem:[%s5 + $0x2c] sm:$0xf]
  %v1245 = vld [vmem:[%s5 + $0x30] sm:$0xf]
  %v1246 = vld [vmem:[%s5 + $0x34] sm:$0xf]
  %v1247 = vld [vmem:[%s5 + $0x38] sm:$0xf]
  %v1248 = vld [vmem:[%s5 + $0x3c] sm:$0xf]
  %v1249 = vld [vmem:[%s5 + $0x40] sm:$0xf]
  %v1250 = vld [vmem:[%s5 + $0x44] sm:$0xf]
  %v1251 = vld [vmem:[%s5 + $0x48] sm:$0xf]
  %v1252 = vld [vmem:[%s5 + $0x4c] sm:$0xf]
  %v1253 = vld [vmem:[%s5 + $0x50] sm:$0xf]
  %v1254 = vld [vmem:[%s5 + $0x54] sm:$0xf]
  %v1255 = vld [vmem:[%s5 + $0x58] sm:$0xf]
  %v1256 = vld [vmem:[%s5 + $0x5c] sm:$0xf]
  %v1257 = vld [vmem:[%s5 + $0x60] sm:$0xf]
  %v1258 = vld [vmem:[%s5 + $0x64] sm:$0xf]
  %v1259 = vld [vmem:[%s5 + $0x68] sm:$0xf]
  %v1260 = vld [vmem:[%s5 + $0x6c] sm:$0xf]
  %v1261 = vld [vmem:[%s5 + $0x70] sm:$0xf]
  %v1262 = vld [vmem:[%s5 + $0x74] sm:$0xf]
  %v1263 = vld [vmem:[%s5 + $0x78] sm:$0xf]
  %v1264 = vld [vmem:[%s5 + $0x7c] sm:$0xf]
  %v1265 = vld [vmem:[%s5 + $0x80] sm:$0xf]
  %v1266 = vld [vmem:[%s5 + $0x84] sm:$0xf]
  %v1267 = vld [vmem:[%s5 + $0x88] sm:$0xf]
  %v1268 = vld [vmem:[%s5 + $0x8c] sm:$0xf]
  %v1269 = vld [vmem:[%s5 + $0x90] sm:$0xf]
  %v1270 = vld [vmem:[%s5 + $0x94] sm:$0xf]
  %v1271 = vld [vmem:[%s5 + $0x98] sm:$0xf]
  %v1272 = vld [vmem:[%s5 + $0x9c] sm:$0xf]
  %v1273 = vld [vmem:[%s5 + $0xa0] sm:$0xf]
  %v1274 = vld [vmem:[%s5 + $0xa4] sm:$0xf]
  %v1275 = vld [vmem:[%s5 + $0xa8] sm:$0xf]
  %v1276 = vld [vmem:[%s5 + $0xac] sm:$0xf]
  %v1277 = vld [vmem:[%s5 + $0xb0] sm:$0xf]
  %v1278 = vld [vmem:[%s5 + $0xb4] sm:$0xf]
  %v1279 = vld [vmem:[%s5 + $0xb8] sm:$0xf]
  %v1280 = vld [vmem:[%s5 + $0xbc] sm:$0xf]
  %v1281 = vld [vmem:[%s5 + $0xc0] sm:$0xf]
  %v1282 = vld [vmem:[%s5 + $0xc4] sm:$0xf]
  %v1283 = vld [vmem:[%s5 + $0xc8] sm:$0xf]
  %v1284 = vld [vmem:[%s5 + $0xcc] sm:$0xf]
  %v1285 = vld [vmem:[%s5 + $0xd0] sm:$0xf]
  %v1286 = vld [vmem:[%s5 + $0xd4] sm:$0xf]
  %v1287 = vld [vmem:[%s5 + $0xd8] sm:$0xf]
  %v1288 = vld [vmem:[%s5 + $0xdc] sm:$0xf]
  %v1289 = vld [vmem:[%s5 + $0xe0] sm:$0xf]
  %v1290 = vld [vmem:[%s5 + $0xe4] sm:$0xf]
  %v1291 = vld [vmem:[%s5 + $0xe8] sm:$0xf]
  %v1292 = vld [vmem:[%s5 + $0xec] sm:$0xf]
  %v1293 = vld [vmem:[%s5 + $0xf0] sm:$0xf]
  %v1294 = vld [vmem:[%s5 + $0xf4] sm:$0xf]
  %v1295 = vld [vmem:[%s5 + $0xf8] sm:$0xf]
  %v1296 = vld [vmem:[%s5 + $0xfc] sm:$0xf]
  %v1297 = vld [vmem:[%s6] sm:$0x1]
  %v1299 = vperm.slane %v1297, 0
  %v1365 = vunpack.c.l.b16 %v1233
  %v1366 = vunpack.c.l.b16 %v1234
  %v1367 = vunpack.c.l.b16 %v1235
  %v1368 = vunpack.c.l.b16 %v1236
  %v1369 = vunpack.c.l.b16 %v1237
  %v1370 = vunpack.c.l.b16 %v1238
  %v1371 = vunpack.c.l.b16 %v1239
  %v1372 = vunpack.c.l.b16 %v1240
  %v1373 = vunpack.c.l.b16 %v1241
  %v1374 = vunpack.c.l.b16 %v1242
  %v1375 = vunpack.c.l.b16 %v1243
  %v1376 = vunpack.c.l.b16 %v1244
  %v1377 = vunpack.c.l.b16 %v1245
  %v1378 = vunpack.c.l.b16 %v1246
  %v1379 = vunpack.c.l.b16 %v1247
  %v1380 = vunpack.c.l.b16 %v1248
  %v1381 = vunpack.c.l.b16 %v1249
  %v1382 = vunpack.c.l.b16 %v1250
  %v1383 = vunpack.c.l.b16 %v1251
  %v1384 = vunpack.c.l.b16 %v1252
  %v1385 = vunpack.c.l.b16 %v1253
  %v1386 = vunpack.c.l.b16 %v1254
  %v1387 = vunpack.c.l.b16 %v1255
  %v1388 = vunpack.c.l.b16 %v1256
  %v1389 = vunpack.c.l.b16 %v1257
  %v1390 = vunpack.c.l.b16 %v1258
  %v1391 = vunpack.c.l.b16 %v1259
  %v1392 = vunpack.c.l.b16 %v1260
  %v1393 = vunpack.c.l.b16 %v1261
  %v1394 = vunpack.c.l.b16 %v1262
  %v1395 = vunpack.c.l.b16 %v1263
  %v1396 = vunpack.c.l.b16 %v1264
  %v1397 = vunpack.c.l.b16 %v1265
  %v1398 = vunpack.c.l.b16 %v1266
  %v1399 = vunpack.c.l.b16 %v1267
  %v1400 = vunpack.c.l.b16 %v1268
  %v1401 = vunpack.c.l.b16 %v1269
  %v1402 = vunpack.c.l.b16 %v1270
  %v1403 = vunpack.c.l.b16 %v1271
  %v1404 = vunpack.c.l.b16 %v1272
  %v1405 = vunpack.c.l.b16 %v1273
  %v1406 = vunpack.c.l.b16 %v1274
  %v1407 = vunpack.c.l.b16 %v1275
  %v1408 = vunpack.c.l.b16 %v1276
  %v1409 = vunpack.c.l.b16 %v1277
  %v1410 = vunpack.c.l.b16 %v1278
  %v1411 = vunpack.c.l.b16 %v1279
  %v1412 = vunpack.c.l.b16 %v1280
  %v1413 = vunpack.c.l.b16 %v1281
  %v1414 = vunpack.c.l.b16 %v1282
  %v1415 = vunpack.c.l.b16 %v1283
  %v1416 = vunpack.c.l.b16 %v1284
  %v1417 = vunpack.c.l.b16 %v1285
  %v1418 = vunpack.c.l.b16 %v1286
  %v1419 = vunpack.c.l.b16 %v1287
  %v1420 = vunpack.c.l.b16 %v1288
  %v1421 = vunpack.c.l.b16 %v1289
  %v1422 = vunpack.c.l.b16 %v1290
  %v1423 = vunpack.c.l.b16 %v1291
  %v1424 = vunpack.c.l.b16 %v1292
  %v1425 = vunpack.c.l.b16 %v1293
  %v1426 = vunpack.c.l.b16 %v1294
  %v1427 = vunpack.c.l.b16 %v1295
  %v1428 = vunpack.c.l.b16 %v1296
  %v1429 = vpack.c.b16 %v1366, %v1365
  %v1430 = vpack.c.b16 %v1368, %v1367
  %v1431 = vpack.c.b16 %v1370, %v1369
  %v1432 = vpack.c.b16 %v1372, %v1371
  %v1433 = vpack.c.b16 %v1374, %v1373
  %v1434 = vpack.c.b16 %v1376, %v1375
  %v1435 = vpack.c.b16 %v1378, %v1377
  %v1436 = vpack.c.b16 %v1380, %v1379
  %v1437 = vpack.c.b16 %v1382, %v1381
  %v1438 = vpack.c.b16 %v1384, %v1383
  %v1439 = vpack.c.b16 %v1386, %v1385
  %v1440 = vpack.c.b16 %v1388, %v1387
  %v1441 = vpack.c.b16 %v1390, %v1389
  %v1442 = vpack.c.b16 %v1392, %v1391
  %v1443 = vpack.c.b16 %v1394, %v1393
  %v1444 = vpack.c.b16 %v1396, %v1395
  %v1445 = vpack.c.b16 %v1398, %v1397
  %v1446 = vpack.c.b16 %v1400, %v1399
  %v1447 = vpack.c.b16 %v1402, %v1401
  %v1448 = vpack.c.b16 %v1404, %v1403
  %v1449 = vpack.c.b16 %v1406, %v1405
  %v1450 = vpack.c.b16 %v1408, %v1407
  %v1451 = vpack.c.b16 %v1410, %v1409
  %v1452 = vpack.c.b16 %v1412, %v1411
  %v1453 = vpack.c.b16 %v1414, %v1413
  %v1454 = vpack.c.b16 %v1416, %v1415
  %v1455 = vpack.c.b16 %v1418, %v1417
  %v1456 = vpack.c.b16 %v1420, %v1419
  %v1457 = vpack.c.b16 %v1422, %v1421
  %v1458 = vpack.c.b16 %v1424, %v1423
  %v1459 = vpack.c.b16 %v1426, %v1425
  %v1460 = vpack.c.b16 %v1428, %v1427
  %1493 = vmatpush.bf16.msra.mxu0 %v1436
  %1494 = vmatpush.bf16.msra.mxu0 %v1435
  %1495 = vmatpush.bf16.msra.mxu0 %v1434
  %1496 = vmatpush.bf16.msra.mxu0 %v1433
  %1497 = vmatpush.bf16.msra.mxu0 %v1432
  %1498 = vmatpush.bf16.msra.mxu0 %v1431
  %1499 = vmatpush.bf16.msra.mxu0 %v1430
  %1500 = vmatpush.bf16.msra.mxu0 %v1429
  %1501 = vmatmul.bf16.gmra.mxu0 %v1229
  %v1502 = vpop.f32.mrf.mxu0
  %v1503 = vadd.f32 %v1299, %v1502
  %v1504 = vpop.f32.mrf.mxu0
  %1505 = vdwg.mxu0
  %1506 = vmatpush.bf16.msra.mxu0 %v1444
  %1507 = vmatpush.bf16.msra.mxu0 %v1443
  %1508 = vmatpush.bf16.msra.mxu0 %v1442
  %1509 = vmatpush.bf16.msra.mxu0 %v1441
  %1510 = vmatpush.bf16.msra.mxu0 %v1440
  %1511 = vmatpush.bf16.msra.mxu0 %v1439
  %1512 = vmatpush.bf16.msra.mxu0 %v1438
  %1513 = vmatpush.bf16.msra.mxu0 %v1437
  %1514 = vmatmul.bf16.gmra.mxu0 %v1230
  %v1515 = vpop.f32.mrf.mxu0
  %v1516 = vadd.f32 %v1503, %v1515
  %v1517 = vpop.f32.mrf.mxu0
  %1518 = vdwg.mxu0
  %1519 = vmatpush.bf16.msra.mxu0 %v1452
  %1520 = vmatpush.bf16.msra.mxu0 %v1451
  %1521 = vmatpush.bf16.msra.mxu0 %v1450
  %1522 = vmatpush.bf16.msra.mxu0 %v1449
  %1523 = vmatpush.bf16.msra.mxu0 %v1448
  %1524 = vmatpush.bf16.msra.mxu0 %v1447
  %1525 = vmatpush.bf16.msra.mxu0 %v1446
  %1526 = vmatpush.bf16.msra.mxu0 %v1445
  %1527 = vmatmul.bf16.gmra.mxu0 %v1231
  %v1528 = vpop.f32.mrf.mxu0
  %v1529 = vadd.f32 %v1516, %v1528
  %v1530 = vpop.f32.mrf.mxu0
  %1531 = vdwg.mxu0
  %1532 = vmatpush.bf16.msra.mxu0 %v1460
  %1533 = vmatpush.bf16.msra.mxu0 %v1459
  %1534 = vmatpush.bf16.msra.mxu0 %v1458
  %1535 = vmatpush.bf16.msra.mxu0 %v1457
  %1536 = vmatpush.bf16.msra.mxu0 %v1456
  %1537 = vmatpush.bf16.msra.mxu0 %v1455
  %1538 = vmatpush.bf16.msra.mxu0 %v1454
  %1539 = vmatpush.bf16.msra.mxu0 %v1453
  %1540 = vmatmul.bf16.gmra.mxu0 %v1232
  %v1541 = vpop.f32.mrf.mxu0
  %v1542 = vadd.f32 %v1529, %v1541
  %v1543 = vpop.f32.mrf.mxu0
  %1544 = vdwg.mxu0
  %1545 = vst [vmem:[%s7] sm:$0xff] %v1542
  // Predicated region
  $region30: #{forward.1} parent=0 // pred_check
    _
  $region31: #{forward.1} parent=0 // pred_check_branch
    %1547 = sbr.rel (0) target = $region33
  $region32: #{forward.1} parent=0 // pred_region
    _
  $region33: #{forward.1} parent=0 // pred_fallthru
    _
  // Predicated region
  $region34: #{forward.1} parent=0 // pred_check
    _
  $region35: #{forward.1} parent=0 // pred_check_branch
    %1549 = sbr.rel (0) target = $region37
  $region36: #{forward.1} parent=0 // pred_region
    _
  $region37: #{forward.1} parent=0 // pred_fallthru
    _

</llo_original>
